<compile_context>
chip_gen: v7x
topology: tpu7x:2x2x1
jax: 0.10.0
libtpu: 0.0.40
codegen_flags: <defaults>
</compile_context>

<pallas_src>
import functools

import jax
import jax.numpy as jnp
from jax import lax
from jax.experimental import pallas as pl
from jax.experimental.pallas import tpu as pltpu


def _estimate_vmem(th, Wd, Cin, Cmid, Ch):
    """Rough per-grid-step VMEM estimate (bytes) for tile-row count `th`."""
    rows = th + 4
    bf2, f4 = 2, 4
    inp = 2 * rows * 2 * Wd * 2 * Cin * bf2            # double-buffered bf16 input block
    out = 2 * th * Wd * (Cin + Ch) * f4                # double-buffered f32 output block
    wts = 2 * 9 * (Cin * Cmid + Cmid * Ch) * bf2       # double-buffered bf16 weights
    live = rows * Wd * (Cin * bf2                      # pooled slab (bf16)
                        + 3 * max(Cin, Cmid) * bf2 * 2 # per-ky patch slab + taps (bf16)
                        + Cmid * (f4 + bf2)            # conv1 f32 acc + bf16 copy
                        + Ch * f4                      # conv2 f32 acc
                        + (Cin + Ch) * f4 * 2)         # concat + lane-dense copy (f32)
    return inp + out + wts + live


def _pick_tile_rows(Hd, Wd, Cin, Cmid, Ch, budget_bytes=12 * 1024 * 1024):
    """Largest TH (a multiple of 8 dividing Hd, or Hd itself) fitting the VMEM budget."""
    cands = [Hd] + [t for t in range((Hd // 8) * 8, 0, -8) if t > 0 and Hd % t == 0]
    cands = sorted(set(cands), reverse=True)
    for th in cands:
        if _estimate_vmem(th, Wd, Cin, Cmid, Ch) <= budget_bytes:
            return th
    return cands[-1]


def _conv3x3_bn_relu_validh(x, w_ref, s_ref, b_ref, *, Hout, Wd, Cin, Cout):
    """3x3 conv, VALID in H (input carries a 1-row halo per side), zero-SAME in W,
    followed by folded inference-mode BatchNorm + ReLU.

    x:      (Hout + 2, Wd, Cin) bf16 value.
    w_ref:  (3, 3*Cin, Cout) bf16 ref, laid out [ky, kx*Cin + ci, co].
    s_ref, b_ref: (1, Cout) f32 folded BN scale / bias.
    Returns (Hout * Wd, Cout) f32 (post BN + ReLU).
    """
    zcol = jnp.zeros((Hout, 1, Cin), x.dtype)
    acc = jnp.zeros((Hout * Wd, Cout), jnp.float32)
    # K split over ky: three accumulating K=3*Cin MXU matmuls instead of one 9-tap
    # im2col slab -> ~3x lower peak live-value / vreg pressure.
    for ky in range(3):
        xh = x[ky:ky + Hout]                                        # (Hout, Wd, Cin)
        left = jnp.concatenate([zcol, xh[:, :Wd - 1]], axis=1)      # tap w-1
        right = jnp.concatenate([xh[:, 1:], zcol], axis=1)          # tap w+1
        patches = jnp.concatenate([left, xh, right], axis=-1)       # (Hout, Wd, 3*Cin)
        acc = acc + jnp.dot(patches.reshape(Hout * Wd, 3 * Cin), w_ref[ky],
                            preferred_element_type=jnp.float32)
    return jnp.maximum(acc * s_ref[...] + b_ref[...], 0.0)


def _downskip_kernel(x_ref, w1_ref, s1_ref, b1_ref, w2_ref, s2_ref, b2_ref,
                     out_ref, *, TH, Wd, Cin, Cmid, Ch, Hd):
    t = pl.program_id(1)

    # --- 2x2 max-pool: the wrapper regrouped the pooling windows, so this is two
    #     plain VPU maxes (no strided refs, no scratch). ---
    xb = x_ref[...]                                             # (TH+4, 2, Wd, 2*Cin)
    hmax = jnp.maximum(xb[:, 0], xb[:, 1])                      # max over h%2
    pooled = jnp.maximum(hmax[..., :Cin], hmax[..., Cin:])      # max over w%2 -> (TH+4, Wd, Cin)

    # --- conv1 + BN + ReLU (tile rows plus a 1-row halo each side for conv2) ---
    h1 = _conv3x3_bn_relu_validh(pooled, w1_ref, s1_ref, b1_ref,
                                 Hout=TH + 2, Wd=Wd, Cin=Cin, Cout=Cmid)
    h1 = h1.reshape(TH + 2, Wd, Cmid)
    # Halo rows outside the image must be zero: conv2's SAME padding is a zero row of
    # conv1's *output*, not conv1 applied to the zero padding.
    g = (t * TH - 1) + lax.broadcasted_iota(jnp.int32, (TH + 2, 1, 1), 0)
    h1 = jnp.where((g >= 0) & (g < Hd), h1, 0.0).astype(jnp.bfloat16)

    # --- conv2 + BN + ReLU ---
    h2 = _conv3x3_bn_relu_validh(h1, w2_ref, s2_ref, b2_ref,
                                 Hout=TH, Wd=Wd, Cin=Cmid, Cout=Ch)

    # --- concat([x_down, x_conv], channel axis), single lane-dense store ---
    skip = pooled[2:TH + 2].astype(jnp.float32)                 # (TH, Wd, Cin)
    out = jnp.concatenate([skip, h2.reshape(TH, Wd, Ch)], axis=-1)   # (TH, Wd, Cin+Ch)
    out_ref[...] = out.reshape(TH, Wd * (Cin + Ch)).astype(out_ref.dtype)


def downskip_pallas(x_nchw, w1_oihw, scale1, bias1, w2_oihw, scale2, bias2):
    """DownSkip forward. Input/output are NCHW (PyTorch convention), f32 in / f32 out."""
    N, Cin, H, W = x_nchw.shape
    Hd, Wd = H // 2, W // 2
    Cmid = w1_oihw.shape[0]
    Ch = w2_oihw.shape[0]
    Cout = Cin + Ch

    # MaxPool2d(2) floor mode: drop odd trailing row / column.
    x_nchw = x_nchw[:, :, :2 * Hd, :2 * Wd]

    TH = _pick_tile_rows(Hd, Wd, Cin, Cmid, Ch)
    nT = Hd // TH

    # ---- layout plumbing (outside the kernel) ----
    # NCHW -> NHWC (bf16), regroup 2x2 pooling windows:
    #   (N, H, W, C) -> (N, Hd, 2, Wd, 2*Cin)   (minor index = (w%2)*Cin + c).
    x_nhwc = jnp.transpose(x_nchw, (0, 2, 3, 1)).astype(jnp.bfloat16)
    x_grp = x_nhwc.reshape(N, Hd, 2, Wd, 2 * Cin)
    # 2 zero pooled-rows of halo per side (SAME padding for the two stacked 3x3 convs),
    # then materialise the overlapping row tiles so the kernel uses plain Blocked
    # BlockSpecs with automatic pipelining (duplicates only 4/TH of the input rows).
    x_pad = jnp.pad(x_grp, ((0, 0), (2, 2), (0, 0), (0, 0), (0, 0)))
    x_tiles = jnp.stack([x_pad[:, i * TH:i * TH + TH + 4] for i in range(nT)], axis=1)
    # (N, nT, TH+4, 2, Wd, 2*Cin)

    # OIHW -> (ky, kx*Cin + ci, co) bf16 for the three accumulating K=3*Cin matmuls.
    w1 = jnp.transpose(w1_oihw, (2, 3, 1, 0)).reshape(3, 3 * Cin, Cmid).astype(jnp.bfloat16)
    w2 = jnp.transpose(w2_oihw, (2, 3, 1, 0)).reshape(3, 3 * Cmid, Ch).astype(jnp.bfloat16)
    s1 = scale1.reshape(1, Cmid).astype(jnp.float32)
    b1 = bias1.reshape(1, Cmid).astype(jnp.float32)
    s2 = scale2.reshape(1, Ch).astype(jnp.float32)
    b2 = bias2.reshape(1, Ch).astype(jnp.float32)

    kernel = functools.partial(_downskip_kernel, TH=TH, Wd=Wd, Cin=Cin,
                               Cmid=Cmid, Ch=Ch, Hd=Hd)

    out = pl.pallas_call(
        kernel,
        out_shape=jax.ShapeDtypeStruct((N, Hd, Wd * Cout), jnp.float32),
        grid=(N, nT),
        in_specs=[
            pl.BlockSpec((None, None, TH + 4, 2, Wd, 2 * Cin),
                         lambda n, t: (n, t, 0, 0, 0, 0)),
            pl.BlockSpec((3, 3 * Cin, Cmid), lambda n, t: (0, 0, 0)),
            pl.BlockSpec((1, Cmid), lambda n, t: (0, 0)),
            pl.BlockSpec((1, Cmid), lambda n, t: (0, 0)),
            pl.BlockSpec((3, 3 * Cmid, Ch), lambda n, t: (0, 0, 0)),
            pl.BlockSpec((1, Ch), lambda n, t: (0, 0)),
            pl.BlockSpec((1, Ch), lambda n, t: (0, 0)),
        ],
        out_specs=pl.BlockSpec((None, TH, Wd * Cout), lambda n, t: (n, t, 0)),
        compiler_params=pltpu.CompilerParams(
            dimension_semantics=("parallel", "parallel"),
            vmem_limit_bytes=40 * 1024 * 1024),
    )(x_tiles, w1, s1, b1, w2, s2, b2)

    # lane-dense (N, Hd, Wd*Cout) -> NCHW
    return jnp.transpose(out.reshape(N, Hd, Wd, Cout), (0, 3, 1, 2))


def _reference(x_nchw, w1_oihw, scale1, bias1, w2_oihw, scale2, bias2):
    """Plain-JAX f32 reference of DownSkip.forward (inference-mode BN)."""
    N, C, H, W = x_nchw.shape
    Hd, Wd = H // 2, W // 2
    xd = x_nchw[:, :, :2 * Hd, :2 * Wd].reshape(N, C, Hd, 2, Wd, 2).max(axis=(3, 5))

    def conv_bn_relu(x, w, s, b):
        y = lax.conv_general_dilated(x, w, (1, 1), 'SAME',
                                     dimension_numbers=('NCHW', 'OIHW', 'NCHW'),
                                     precision=lax.Precision.HIGHEST)
        y = y * s.reshape(1, -1, 1, 1) + b.reshape(1, -1, 1, 1)
        return jnp.maximum(y, 0.0)

    h1 = conv_bn_relu(xd, w1_oihw, scale1, bias1)
    h2 = conv_bn_relu(h1, w2_oihw, scale2, bias2)
    return jnp.concatenate([xd, h2], axis=1)


if __name__ == "__main__":
    # DownSkip(in_channels=4, out_channels=8): conv branch has out_channels//2 = 4 channels.
    N, Cin, H, W = 2, 4, 16, 16
    out_channels = 8
    Ch = out_channels // 2      # conv-branch output channels
    Cmid = Ch                   # DoubleConv mid_channels defaults to its out_channels
    eps = 1e-5

    key = jax.random.PRNGKey(0)
    ks = jax.random.split(key, 11)
    x = jax.random.normal(ks[0], (N, Cin, H, W), jnp.float32)

    # conv weights (PyTorch OIHW layout, bias=False)
    w1 = 0.1 * jax.random.normal(ks[1], (Cmid, Cin, 3, 3), jnp.float32)
    w2 = 0.1 * jax.random.normal(ks[2], (Ch, Cmid, 3, 3), jnp.float32)

    # BatchNorm params + running stats, folded to per-channel (scale, bias)
    g1 = 0.5 + jax.random.uniform(ks[3], (Cmid,), jnp.float32)
    be1 = 0.1 * jax.random.normal(ks[4], (Cmid,), jnp.float32)
    m1 = 0.1 * jax.random.normal(ks[5], (Cmid,), jnp.float32)
    v1 = 0.5 + jax.random.uniform(ks[6], (Cmid,), jnp.float32)
    g2 = 0.5 + jax.random.uniform(ks[7], (Ch,), jnp.float32)
    be2 = 0.1 * jax.random.normal(ks[8], (Ch,), jnp.float32)
    m2 = 0.1 * jax.random.normal(ks[9], (Ch,), jnp.float32)
    v2 = 0.5 + jax.random.uniform(ks[10], (Ch,), jnp.float32)

    scale1 = g1 / jnp.sqrt(v1 + eps)
    bias1 = be1 - m1 * scale1
    scale2 = g2 / jnp.sqrt(v2 + eps)
    bias2 = be2 - m2 * scale2

    out = downskip_pallas(x, w1, scale1, bias1, w2, scale2, bias2)
    out = jax.block_until_ready(out)

    ref = _reference(x, w1, scale1, bias1, w2, scale2, bias2)
    assert out.shape == (N, Cin + Ch, H // 2, W // 2), out.shape
    # 2e-2 tolerance: bf16 activations/weights on the MXU vs HIGHEST-precision f32 XLA conv.
    assert jnp.allclose(out, ref, atol=2e-2, rtol=2e-2), float(jnp.max(jnp.abs(out - ref)))

    print("KERNEL_OK")
</pallas_src>

<mosaic_0001>
module attributes {stable_mosaic.version = 11 : i64} {
  func.func @_downskip_kernel(%arg0: i32, %arg1: i32, %arg2: memref<1x1x12x2x8x8xbf16, #tpu.memory_space<vmem>>, %arg3: memref<3x12x4xbf16, #tpu.memory_space<vmem>>, %arg4: memref<1x4xf32, #tpu.memory_space<vmem>>, %arg5: memref<1x4xf32, #tpu.memory_space<vmem>>, %arg6: memref<3x12x4xbf16, #tpu.memory_space<vmem>>, %arg7: memref<1x4xf32, #tpu.memory_space<vmem>>, %arg8: memref<1x4xf32, #tpu.memory_space<vmem>>, %arg9: memref<1x8x64xf32, #tpu.memory_space<vmem>>) attributes {dimension_semantics = [#tpu.dimension_semantics<parallel>, #tpu.dimension_semantics<parallel>], iteration_bounds = array<i64: 2, 1>, scalar_prefetch = 0 : i64, scratch_operands = 0 : i64, tpu.core_type = #tpu.core_type<tc>, window_params = [{transform_indices = @transform_0, window_bounds = array<i64: 1, 1, 12, 2, 8, 8>}, {pipeline_mode = #tpu.pipeline_mode<synchronous>, transform_indices = @transform_1, window_bounds = array<i64: 3, 12, 4>}, {pipeline_mode = #tpu.pipeline_mode<synchronous>, transform_indices = @transform_2, window_bounds = array<i64: 1, 4>}, {pipeline_mode = #tpu.pipeline_mode<synchronous>, transform_indices = @transform_3, window_bounds = array<i64: 1, 4>}, {pipeline_mode = #tpu.pipeline_mode<synchronous>, transform_indices = @transform_4, window_bounds = array<i64: 3, 12, 4>}, {pipeline_mode = #tpu.pipeline_mode<synchronous>, transform_indices = @transform_5, window_bounds = array<i64: 1, 4>}, {pipeline_mode = #tpu.pipeline_mode<synchronous>, transform_indices = @transform_6, window_bounds = array<i64: 1, 4>}, {transform_indices = @transform_7, window_bounds = array<i64: 1, 8, 64>}]} {
    %c0 = arith.constant 0 : index
    %c0_0 = arith.constant 0 : index
    %c0_1 = arith.constant 0 : index
    %c0_2 = arith.constant 0 : index
    %c0_3 = arith.constant 0 : index
    %c0_4 = arith.constant 0 : index
    %0 = vector.load %arg2[%c0, %c0_0, %c0_1, %c0_2, %c0_3, %c0_4] : memref<1x1x12x2x8x8xbf16, #tpu.memory_space<vmem>>, vector<1x1x12x2x8x8xbf16>
    %1 = vector.shape_cast %0 : vector<1x1x12x2x8x8xbf16> to vector<12x2x8x8xbf16>
    %2 = vector.extract_strided_slice %1 {offsets = [0, 0, 0, 0], sizes = [12, 1, 8, 8], strides = [1, 1, 1, 1]} : vector<12x2x8x8xbf16> to vector<12x1x8x8xbf16>
    %3 = vector.shape_cast %2 : vector<12x1x8x8xbf16> to vector<12x8x8xbf16>
    %4 = vector.extract_strided_slice %1 {offsets = [0, 1, 0, 0], sizes = [12, 1, 8, 8], strides = [1, 1, 1, 1]} : vector<12x2x8x8xbf16> to vector<12x1x8x8xbf16>
    %5 = vector.shape_cast %4 : vector<12x1x8x8xbf16> to vector<12x8x8xbf16>
    %6 = arith.maximumf %3, %5 : vector<12x8x8xbf16>
    %7 = vector.extract_strided_slice %6 {offsets = [0, 0, 0], sizes = [12, 8, 4], strides = [1, 1, 1]} : vector<12x8x8xbf16> to vector<12x8x4xbf16>
    %8 = vector.extract_strided_slice %6 {offsets = [0, 0, 4], sizes = [12, 8, 4], strides = [1, 1, 1]} : vector<12x8x8xbf16> to vector<12x8x4xbf16>
    %9 = arith.maximumf %7, %8 : vector<12x8x4xbf16>
    %cst = arith.constant 0.000000e+00 : bf16
    %10 = vector.broadcast %cst : bf16 to vector<10x1x4xbf16>
    %cst_5 = arith.constant 0.000000e+00 : f32
    %11 = vector.broadcast %cst_5 : f32 to vector<80x4xf32>
    %12 = vector.extract_strided_slice %9 {offsets = [0, 0, 0], sizes = [10, 8, 4], strides = [1, 1, 1]} : vector<12x8x4xbf16> to vector<10x8x4xbf16>
    %13 = vector.extract_strided_slice %12 {offsets = [0, 0, 0], sizes = [10, 7, 4], strides = [1, 1, 1]} : vector<10x8x4xbf16> to vector<10x7x4xbf16>
    %14 = tpu.concatenate %10, %13 in 1 : vector<10x1x4xbf16>, vector<10x7x4xbf16> -> vector<10x8x4xbf16>
    %15 = vector.extract_strided_slice %12 {offsets = [0, 1, 0], sizes = [10, 7, 4], strides = [1, 1, 1]} : vector<10x8x4xbf16> to vector<10x7x4xbf16>
    %16 = tpu.concatenate %15, %10 in 1 : vector<10x7x4xbf16>, vector<10x1x4xbf16> -> vector<10x8x4xbf16>
    %17 = tpu.concatenate %14, %12, %16 in 2 : vector<10x8x4xbf16>, vector<10x8x4xbf16>, vector<10x8x4xbf16> -> vector<10x8x12xbf16>
    %18 = vector.shape_cast %17 : vector<10x8x12xbf16> to vector<80x12xbf16>
    %c0_6 = arith.constant 0 : index
    %c0_7 = arith.constant 0 : index
    %c0_8 = arith.constant 0 : index
    %19 = vector.load %arg3[%c0_6, %c0_7, %c0_8] : memref<3x12x4xbf16, #tpu.memory_space<vmem>>, vector<1x12x4xbf16>
    %20 = vector.shape_cast %19 : vector<1x12x4xbf16> to vector<12x4xbf16>
    %cst_9 = arith.constant dense<0.000000e+00> : vector<80x4xf32>
    %21 = tpu.matmul %18, %20, %cst_9 {dimension_numbers = #tpu.dot_dimension_numbers<[1], [0], [0], [1], [0, 0, 1, 1], [], []>} : vector<80x12xbf16>, vector<12x4xbf16>, vector<80x4xf32> -> vector<80x4xf32>
    %22 = arith.addf %11, %21 : vector<80x4xf32>
    %23 = vector.extract_strided_slice %9 {offsets = [1, 0, 0], sizes = [10, 8, 4], strides = [1, 1, 1]} : vector<12x8x4xbf16> to vector<10x8x4xbf16>
    %24 = vector.extract_strided_slice %23 {offsets = [0, 0, 0], sizes = [10, 7, 4], strides = [1, 1, 1]} : vector<10x8x4xbf16> to vector<10x7x4xbf16>
    %25 = tpu.concatenate %10, %24 in 1 : vector<10x1x4xbf16>, vector<10x7x4xbf16> -> vector<10x8x4xbf16>
    %26 = vector.extract_strided_slice %23 {offsets = [0, 1, 0], sizes = [10, 7, 4], strides = [1, 1, 1]} : vector<10x8x4xbf16> to vector<10x7x4xbf16>
    %27 = tpu.concatenate %26, %10 in 1 : vector<10x7x4xbf16>, vector<10x1x4xbf16> -> vector<10x8x4xbf16>
    %28 = tpu.concatenate %25, %23, %27 in 2 : vector<10x8x4xbf16>, vector<10x8x4xbf16>, vector<10x8x4xbf16> -> vector<10x8x12xbf16>
    %29 = vector.shape_cast %28 : vector<10x8x12xbf16> to vector<80x12xbf16>
    %c1 = arith.constant 1 : index
    %c0_10 = arith.constant 0 : index
    %c0_11 = arith.constant 0 : index
    %30 = vector.load %arg3[%c1, %c0_10, %c0_11] : memref<3x12x4xbf16, #tpu.memory_space<vmem>>, vector<1x12x4xbf16>
    %31 = vector.shape_cast %30 : vector<1x12x4xbf16> to vector<12x4xbf16>
    %cst_12 = arith.constant dense<0.000000e+00> : vector<80x4xf32>
    %32 = tpu.matmul %29, %31, %cst_12 {dimension_numbers = #tpu.dot_dimension_numbers<[1], [0], [0], [1], [0, 0, 1, 1], [], []>} : vector<80x12xbf16>, vector<12x4xbf16>, vector<80x4xf32> -> vector<80x4xf32>
    %33 = arith.addf %22, %32 : vector<80x4xf32>
    %34 = vector.extract_strided_slice %9 {offsets = [2, 0, 0], sizes = [10, 8, 4], strides = [1, 1, 1]} : vector<12x8x4xbf16> to vector<10x8x4xbf16>
    %35 = vector.extract_strided_slice %34 {offsets = [0, 0, 0], sizes = [10, 7, 4], strides = [1, 1, 1]} : vector<10x8x4xbf16> to vector<10x7x4xbf16>
    %36 = tpu.concatenate %10, %35 in 1 : vector<10x1x4xbf16>, vector<10x7x4xbf16> -> vector<10x8x4xbf16>
    %37 = vector.extract_strided_slice %34 {offsets = [0, 1, 0], sizes = [10, 7, 4], strides = [1, 1, 1]} : vector<10x8x4xbf16> to vector<10x7x4xbf16>
    %38 = tpu.concatenate %37, %10 in 1 : vector<10x7x4xbf16>, vector<10x1x4xbf16> -> vector<10x8x4xbf16>
    %39 = tpu.concatenate %36, %34, %38 in 2 : vector<10x8x4xbf16>, vector<10x8x4xbf16>, vector<10x8x4xbf16> -> vector<10x8x12xbf16>
    %40 = vector.shape_cast %39 : vector<10x8x12xbf16> to vector<80x12xbf16>
    %c2 = arith.constant 2 : index
    %c0_13 = arith.constant 0 : index
    %c0_14 = arith.constant 0 : index
    %41 = vector.load %arg3[%c2, %c0_13, %c0_14] : memref<3x12x4xbf16, #tpu.memory_space<vmem>>, vector<1x12x4xbf16>
    %42 = vector.shape_cast %41 : vector<1x12x4xbf16> to vector<12x4xbf16>
    %cst_15 = arith.constant dense<0.000000e+00> : vector<80x4xf32>
    %43 = tpu.matmul %40, %42, %cst_15 {dimension_numbers = #tpu.dot_dimension_numbers<[1], [0], [0], [1], [0, 0, 1, 1], [], []>} : vector<80x12xbf16>, vector<12x4xbf16>, vector<80x4xf32> -> vector<80x4xf32>
    %44 = arith.addf %33, %43 : vector<80x4xf32>
    %c0_16 = arith.constant 0 : index
    %c0_17 = arith.constant 0 : index
    %45 = vector.load %arg4[%c0_16, %c0_17] : memref<1x4xf32, #tpu.memory_space<vmem>>, vector<1x4xf32>
    %46 = vector.broadcast %45 : vector<1x4xf32> to vector<80x4xf32>
    %47 = arith.mulf %44, %46 : vector<80x4xf32>
    %c0_18 = arith.constant 0 : index
    %c0_19 = arith.constant 0 : index
    %48 = vector.load %arg5[%c0_18, %c0_19] : memref<1x4xf32, #tpu.memory_space<vmem>>, vector<1x4xf32>
    %49 = vector.broadcast %48 : vector<1x4xf32> to vector<80x4xf32>
    %50 = arith.addf %47, %49 : vector<80x4xf32>
    %cst_20 = arith.constant 0.000000e+00 : f32
    %51 = vector.broadcast %cst_20 : f32 to vector<80x4xf32>
    %52 = arith.maximumf %50, %51 : vector<80x4xf32>
    %53 = vector.shape_cast %52 : vector<80x4xf32> to vector<10x8x4xf32>
    %c8_i32 = arith.constant 8 : i32
    %54 = arith.muli %arg1, %c8_i32 : i32
    %c1_i32 = arith.constant 1 : i32
    %55 = arith.subi %54, %c1_i32 : i32
    %56 = tpu.iota {dimensions = array<i32: 0>} : vector<10x1x1xi32>
    %57 = vector.broadcast %55 : i32 to vector<10x1x1xi32>
    %58 = arith.addi %57, %56 : vector<10x1x1xi32>
    %c0_i32 = arith.constant 0 : i32
    %59 = vector.broadcast %c0_i32 : i32 to vector<10x1x1xi32>
    %60 = arith.cmpi sge, %58, %59 : vector<10x1x1xi32>
    %c8_i32_21 = arith.constant 8 : i32
    %61 = vector.broadcast %c8_i32_21 : i32 to vector<10x1x1xi32>
    %62 = arith.cmpi slt, %58, %61 : vector<10x1x1xi32>
    %63 = arith.andi %60, %62 : vector<10x1x1xi1>
    %cst_22 = arith.constant 0.000000e+00 : f32
    %64 = vector.shape_cast %63 : vector<10x1x1xi1> to vector<10x1x1xi1>
    %65 = vector.broadcast %64 : vector<10x1x1xi1> to vector<10x8x4xi1>
    %66 = vector.broadcast %cst_22 : f32 to vector<10x8x4xf32>
    %67 = arith.select %65, %53, %66 : vector<10x8x4xi1>, vector<10x8x4xf32>
    %68 = arith.truncf %67 : vector<10x8x4xf32> to vector<10x8x4xbf16>
    %cst_23 = arith.constant 0.000000e+00 : bf16
    %69 = vector.broadcast %cst_23 : bf16 to vector<8x1x4xbf16>
    %cst_24 = arith.constant 0.000000e+00 : f32
    %70 = vector.broadcast %cst_24 : f32 to vector<64x4xf32>
    %71 = vector.extract_strided_slice %68 {offsets = [0, 0, 0], sizes = [8, 8, 4], strides = [1, 1, 1]} : vector<10x8x4xbf16> to vector<8x8x4xbf16>
    %72 = vector.extract_strided_slice %71 {offsets = [0, 0, 0], sizes = [8, 7, 4], strides = [1, 1, 1]} : vector<8x8x4xbf16> to vector<8x7x4xbf16>
    %73 = tpu.concatenate %69, %72 in 1 : vector<8x1x4xbf16>, vector<8x7x4xbf16> -> vector<8x8x4xbf16>
    %74 = vector.extract_strided_slice %71 {offsets = [0, 1, 0], sizes = [8, 7, 4], strides = [1, 1, 1]} : vector<8x8x4xbf16> to vector<8x7x4xbf16>
    %75 = tpu.concatenate %74, %69 in 1 : vector<8x7x4xbf16>, vector<8x1x4xbf16> -> vector<8x8x4xbf16>
    %76 = tpu.concatenate %73, %71, %75 in 2 : vector<8x8x4xbf16>, vector<8x8x4xbf16>, vector<8x8x4xbf16> -> vector<8x8x12xbf16>
    %77 = vector.shape_cast %76 : vector<8x8x12xbf16> to vector<64x12xbf16>
    %c0_25 = arith.constant 0 : index
    %c0_26 = arith.constant 0 : index
    %c0_27 = arith.constant 0 : index
    %78 = vector.load %arg6[%c0_25, %c0_26, %c0_27] : memref<3x12x4xbf16, #tpu.memory_space<vmem>>, vector<1x12x4xbf16>
    %79 = vector.shape_cast %78 : vector<1x12x4xbf16> to vector<12x4xbf16>
    %cst_28 = arith.constant dense<0.000000e+00> : vector<64x4xf32>
    %80 = tpu.matmul %77, %79, %cst_28 {dimension_numbers = #tpu.dot_dimension_numbers<[1], [0], [0], [1], [0, 0, 1, 1], [], []>} : vector<64x12xbf16>, vector<12x4xbf16>, vector<64x4xf32> -> vector<64x4xf32>
    %81 = arith.addf %70, %80 : vector<64x4xf32>
    %82 = vector.extract_strided_slice %68 {offsets = [1, 0, 0], sizes = [8, 8, 4], strides = [1, 1, 1]} : vector<10x8x4xbf16> to vector<8x8x4xbf16>
    %83 = vector.extract_strided_slice %82 {offsets = [0, 0, 0], sizes = [8, 7, 4], strides = [1, 1, 1]} : vector<8x8x4xbf16> to vector<8x7x4xbf16>
    %84 = tpu.concatenate %69, %83 in 1 : vector<8x1x4xbf16>, vector<8x7x4xbf16> -> vector<8x8x4xbf16>
    %85 = vector.extract_strided_slice %82 {offsets = [0, 1, 0], sizes = [8, 7, 4], strides = [1, 1, 1]} : vector<8x8x4xbf16> to vector<8x7x4xbf16>
    %86 = tpu.concatenate %85, %69 in 1 : vector<8x7x4xbf16>, vector<8x1x4xbf16> -> vector<8x8x4xbf16>
    %87 = tpu.concatenate %84, %82, %86 in 2 : vector<8x8x4xbf16>, vector<8x8x4xbf16>, vector<8x8x4xbf16> -> vector<8x8x12xbf16>
    %88 = vector.shape_cast %87 : vector<8x8x12xbf16> to vector<64x12xbf16>
    %c1_29 = arith.constant 1 : index
    %c0_30 = arith.constant 0 : index
    %c0_31 = arith.constant 0 : index
    %89 = vector.load %arg6[%c1_29, %c0_30, %c0_31] : memref<3x12x4xbf16, #tpu.memory_space<vmem>>, vector<1x12x4xbf16>
    %90 = vector.shape_cast %89 : vector<1x12x4xbf16> to vector<12x4xbf16>
    %cst_32 = arith.constant dense<0.000000e+00> : vector<64x4xf32>
    %91 = tpu.matmul %88, %90, %cst_32 {dimension_numbers = #tpu.dot_dimension_numbers<[1], [0], [0], [1], [0, 0, 1, 1], [], []>} : vector<64x12xbf16>, vector<12x4xbf16>, vector<64x4xf32> -> vector<64x4xf32>
    %92 = arith.addf %81, %91 : vector<64x4xf32>
    %93 = vector.extract_strided_slice %68 {offsets = [2, 0, 0], sizes = [8, 8, 4], strides = [1, 1, 1]} : vector<10x8x4xbf16> to vector<8x8x4xbf16>
    %94 = vector.extract_strided_slice %93 {offsets = [0, 0, 0], sizes = [8, 7, 4], strides = [1, 1, 1]} : vector<8x8x4xbf16> to vector<8x7x4xbf16>
    %95 = tpu.concatenate %69, %94 in 1 : vector<8x1x4xbf16>, vector<8x7x4xbf16> -> vector<8x8x4xbf16>
    %96 = vector.extract_strided_slice %93 {offsets = [0, 1, 0], sizes = [8, 7, 4], strides = [1, 1, 1]} : vector<8x8x4xbf16> to vector<8x7x4xbf16>
    %97 = tpu.concatenate %96, %69 in 1 : vector<8x7x4xbf16>, vector<8x1x4xbf16> -> vector<8x8x4xbf16>
    %98 = tpu.concatenate %95, %93, %97 in 2 : vector<8x8x4xbf16>, vector<8x8x4xbf16>, vector<8x8x4xbf16> -> vector<8x8x12xbf16>
    %99 = vector.shape_cast %98 : vector<8x8x12xbf16> to vector<64x12xbf16>
    %c2_33 = arith.constant 2 : index
    %c0_34 = arith.constant 0 : index
    %c0_35 = arith.constant 0 : index
    %100 = vector.load %arg6[%c2_33, %c0_34, %c0_35] : memref<3x12x4xbf16, #tpu.memory_space<vmem>>, vector<1x12x4xbf16>
    %101 = vector.shape_cast %100 : vector<1x12x4xbf16> to vector<12x4xbf16>
    %cst_36 = arith.constant dense<0.000000e+00> : vector<64x4xf32>
    %102 = tpu.matmul %99, %101, %cst_36 {dimension_numbers = #tpu.dot_dimension_numbers<[1], [0], [0], [1], [0, 0, 1, 1], [], []>} : vector<64x12xbf16>, vector<12x4xbf16>, vector<64x4xf32> -> vector<64x4xf32>
    %103 = arith.addf %92, %102 : vector<64x4xf32>
    %c0_37 = arith.constant 0 : index
    %c0_38 = arith.constant 0 : index
    %104 = vector.load %arg7[%c0_37, %c0_38] : memref<1x4xf32, #tpu.memory_space<vmem>>, vector<1x4xf32>
    %105 = vector.broadcast %104 : vector<1x4xf32> to vector<64x4xf32>
    %106 = arith.mulf %103, %105 : vector<64x4xf32>
    %c0_39 = arith.constant 0 : index
    %c0_40 = arith.constant 0 : index
    %107 = vector.load %arg8[%c0_39, %c0_40] : memref<1x4xf32, #tpu.memory_space<vmem>>, vector<1x4xf32>
    %108 = vector.broadcast %107 : vector<1x4xf32> to vector<64x4xf32>
    %109 = arith.addf %106, %108 : vector<64x4xf32>
    %cst_41 = arith.constant 0.000000e+00 : f32
    %110 = vector.broadcast %cst_41 : f32 to vector<64x4xf32>
    %111 = arith.maximumf %109, %110 : vector<64x4xf32>
    %112 = vector.extract_strided_slice %9 {offsets = [2, 0, 0], sizes = [8, 8, 4], strides = [1, 1, 1]} : vector<12x8x4xbf16> to vector<8x8x4xbf16>
    %113 = arith.extf %112 : vector<8x8x4xbf16> to vector<8x8x4xf32>
    %114 = vector.shape_cast %111 : vector<64x4xf32> to vector<8x8x4xf32>
    %115 = tpu.concatenate %113, %114 in 2 : vector<8x8x4xf32>, vector<8x8x4xf32> -> vector<8x8x8xf32>
    %116 = vector.shape_cast %115 : vector<8x8x8xf32> to vector<8x64xf32>
    %c0_42 = arith.constant 0 : index
    %c0_43 = arith.constant 0 : index
    %c0_44 = arith.constant 0 : index
    %117 = vector.load %arg9[%c0_42, %c0_43, %c0_44] : memref<1x8x64xf32, #tpu.memory_space<vmem>>, vector<1x8x64xf32>
    %118 = vector.shape_cast %117 : vector<1x8x64xf32> to vector<8x64xf32>
    %119 = vector.shape_cast %116 : vector<8x64xf32> to vector<1x8x64xf32>
    tpu.vector_store %arg9[%c0_42, %c0_43, %c0_44], %119 {strides = array<i32>} : memref<1x8x64xf32, #tpu.memory_space<vmem>>, vector<1x8x64xf32>,
    return
  }
  func.func @transform_0(%arg0: i32, %arg1: i32) -> (i32, i32, i32, i32, i32, i32) {
    %c0_i32 = arith.constant 0 : i32
    %c0_i32_0 = arith.constant 0 : i32
    %c0_i32_1 = arith.constant 0 : i32
    %c0_i32_2 = arith.constant 0 : i32
    %c0_i32_3 = arith.constant 0 : i32
    return %arg0, %arg1, %c0_i32, %c0_i32_0, %c0_i32_1, %c0_i32_2 : i32, i32, i32, i32, i32, i32
  }
  func.func @transform_1(%arg0: i32, %arg1: i32) -> (i32, i32, i32) {
    %c0_i32 = arith.constant 0 : i32
    %c0_i32_0 = arith.constant 0 : i32
    %c0_i32_1 = arith.constant 0 : i32
    %c0_i32_2 = arith.constant 0 : i32
    return %c0_i32, %c0_i32_0, %c0_i32_1 : i32, i32, i32
  }
  func.func @transform_2(%arg0: i32, %arg1: i32) -> (i32, i32) {
    %c0_i32 = arith.constant 0 : i32
    %c0_i32_0 = arith.constant 0 : i32
    %c0_i32_1 = arith.constant 0 : i32
    return %c0_i32, %c0_i32_0 : i32, i32
  }
  func.func @transform_3(%arg0: i32, %arg1: i32) -> (i32, i32) {
    %c0_i32 = arith.constant 0 : i32
    %c0_i32_0 = arith.constant 0 : i32
    %c0_i32_1 = arith.constant 0 : i32
    return %c0_i32, %c0_i32_0 : i32, i32
  }
  func.func @transform_4(%arg0: i32, %arg1: i32) -> (i32, i32, i32) {
    %c0_i32 = arith.constant 0 : i32
    %c0_i32_0 = arith.constant 0 : i32
    %c0_i32_1 = arith.constant 0 : i32
    %c0_i32_2 = arith.constant 0 : i32
    return %c0_i32, %c0_i32_0, %c0_i32_1 : i32, i32, i32
  }
  func.func @transform_5(%arg0: i32, %arg1: i32) -> (i32, i32) {
    %c0_i32 = arith.constant 0 : i32
    %c0_i32_0 = arith.constant 0 : i32
    %c0_i32_1 = arith.constant 0 : i32
    return %c0_i32, %c0_i32_0 : i32, i32
  }
  func.func @transform_6(%arg0: i32, %arg1: i32) -> (i32, i32) {
    %c0_i32 = arith.constant 0 : i32
    %c0_i32_0 = arith.constant 0 : i32
    %c0_i32_1 = arith.constant 0 : i32
    return %c0_i32, %c0_i32_0 : i32, i32
  }
  func.func @transform_7(%arg0: i32, %arg1: i32) -> (i32, i32, i32) {
    %c0_i32 = arith.constant 0 : i32
    %c0_i32_0 = arith.constant 0 : i32
    return %arg0, %arg1, %c0_i32 : i32, i32, i32
  }
}

</mosaic_0001>

<llo_original>
// kernel: tpu_custom_call.1
$region0: #{tpu_custom_call.1}
  #allocation0 [shape = 'u32[]', space=smem, size = 0x4, offset = 0x4, fixed_abs, tag = 'smem constant byte address 0x4 - core index']
  #allocation1 [shape = 'u32[144,128]{1,0:T(1,128)}', space=vmem, size = 0x12000, scoped, tag = 'internal scratch']
  %s0 = inlined_call_operand.vmem [shape: bf16[2,1,12,2,8,8], index: 0, kind: input, shape index: {}]
  %s1 = inlined_call_operand.vmem [shape: bf16[3,12,4], index: 1, kind: input, shape index: {}]
  %s2 = inlined_call_operand.vmem [shape: f32[1,4], index: 2, kind: input, shape index: {}]
  %s3 = inlined_call_operand.vmem [shape: f32[1,4], index: 3, kind: input, shape index: {}]
  %s4 = inlined_call_operand.vmem [shape: bf16[3,12,4], index: 4, kind: input, shape index: {}]
  %s5 = inlined_call_operand.vmem [shape: f32[1,4], index: 5, kind: input, shape index: {}]
  %s6 = inlined_call_operand.vmem [shape: f32[1,4], index: 6, kind: input, shape index: {}]
  %s7 = inlined_call_operand.hbm [shape: f32[2,8,64], index: 7, kind: output, shape index: {}]
  %s8 = sld [smem:[#allocation0]]
  $region61: #{tpu_custom_call.1} parent=0
    _
  %s10 = ssub.s32 1, %s8
  %s11 = scalar_select 0, %s10, %s8
  $region1: #{tpu_custom_call.1} parent=0
    #allocation2 [shape = 'u8[8192]{0}', space=vmem, size = 0x2000, scoped, tag = 'output window, operand 0']
    #allocation3 [shape = 's32[2]{0}', space=sflag, size = 0x8, scoped, tag = 'scoped memory for tpu_custom_call.1']
    %12 = vsyncpa [#allocation3], 0
    %s13 = scalar_lea.sflag [#allocation3], 1
    %14 = vsyncpa %s13, 0
    loop: start=0, step=1, limit=4
    $region2: #{tpu_custom_call.1} parent=1 // loop_pre_header
      _
    $region3: #{tpu_custom_call.1} parent=1 // loop_header
      %s16 = sphi 0, %s20
      %p17 = scmp.ge.s32.totalorder %s16, 4
      %s23 = sphi 0, %s35
      %s24 = sphi 0, %s31
      %s25 = sphi 0, %s23
      %s26 = sphi 0, %s24
      %s27 = sphi 0, %s25
      %s28 = sphi 0, %s26
      %s40 = sphi 0, %s42
      %s43 = sphi 0, %s40
      %s44 = sphi 0, %s43
      %s60 = sphi 0, %s44
      %s64 = sphi 0, %s64
      %s66 = sphi 0, %s64
      %s67 = sphi 0, %s66
      %s81 = sphi 0, %s67
      %s85 = sphi 0, %s85
      %s87 = sphi 0, %s85
      %s88 = sphi 0, %s87
      %s102 = sphi 0, %s88
      %s106 = sphi 0, %s106
      %s108 = sphi 0, %s106
      %s109 = sphi 0, %s108
      %s123 = sphi 0, %s109
      %s127 = sphi 0, %s127
      %s129 = sphi 0, %s127
      %s130 = sphi 0, %s129
      %s144 = sphi 0, %s130
      %s148 = sphi 0, %s148
      %s150 = sphi 0, %s148
      %s151 = sphi 0, %s150
      %s165 = sphi 0, %s151
      %s169 = sphi 0, %s169
      %s171 = sphi 0, %s169
      %s172 = sphi 0, %s171
      %s186 = sphi 0, %s172
      %s194 = sphi 0, %s196
      %s197 = sphi 0, %s194
      %s198 = sphi 0, %s197
      %s214 = sphi 0, %s198
    $region4: #{tpu_custom_call.1} parent=1 // loop_header_branch
      %19 = sbr.rel (%p17) target = $region8
    $region5: #{tpu_custom_call.1} parent=1 // loop_body
      %s21 = ssub.s32 %s16, 1
      %s22 = ssub.s32 %s16, 2
      %s29 = sadd.s32 1, %s24
      %p30 = scmp.ge.s32.totalorder %s29, 1
      %s31 = scalar_select %p30, 0, %s29
      %s32 = sadd.s32 1, %s23
      %s33 = scalar_select %p30, %s32, %s23
      %p34 = scmp.ge.s32.totalorder %s33, 2
      %s35 = scalar_select %p34, 0, %s33
      %s36 = ssub.s32 %s23, %s35
      %s37 = ssub.s32 %s24, %s31
      %s38 = sor.u32 %s36, %s37
      %p39 = scmp.eq.s32.totalorder %s38, 0
      %s41 = sadd.s32 %s40, 1
      %s42 = scalar_select %p39, %s40, %s41
      %p45 = pneg %p39
      %p46 = scmp.eq.s32.totalorder %s16, 1
      %p47 = por %p45, %p46
      %p48 = scmp.ne.s32.totalorder %s40, %s43
      %p49 = scmp.eq.s32.totalorder %s16, 0
      %p50 = por %p48, %p49
      %p51 = scmp.ne.s32.totalorder %s40, %s43
      %p52 = scmp.eq.s32.totalorder %s21, 1
      %p53 = por %p51, %p52
      %p54 = scmp.ne.s32.totalorder %s43, %s44
      %p55 = scmp.eq.s32.totalorder %s21, 0
      %p56 = por %p54, %p55
      %p57 = scmp.ne.s32.totalorder %s43, %s44
      %p58 = scmp.eq.s32.totalorder %s22, 1
      %p59 = por %p57, %p58
      %p61 = scmp.ne.s32.totalorder %s44, %s60
      %p62 = scmp.eq.s32.totalorder %s22, 0
      %p63 = por %p61, %p62
      %s65 = sadd.s32 %s64, 1
      %p68 = scmp.eq.s32.totalorder %s16, 1
      %p69 = scmp.ne.s32.totalorder %s64, %s66
      %p70 = scmp.eq.s32.totalorder %s16, 0
      %p71 = por %p69, %p70
      %p72 = scmp.ne.s32.totalorder %s64, %s66
      %p73 = scmp.eq.s32.totalorder %s21, 1
      %p74 = por %p72, %p73
      %p75 = scmp.ne.s32.totalorder %s66, %s67
      %p76 = scmp.eq.s32.totalorder %s21, 0
      %p77 = por %p75, %p76
      %p78 = scmp.ne.s32.totalorder %s66, %s67
      %p79 = scmp.eq.s32.totalorder %s22, 1
      %p80 = por %p78, %p79
      %p82 = scmp.ne.s32.totalorder %s67, %s81
      %p83 = scmp.eq.s32.totalorder %s22, 0
      %p84 = por %p82, %p83
      %s86 = sadd.s32 %s85, 1
      %p89 = scmp.eq.s32.totalorder %s16, 1
      %p90 = scmp.ne.s32.totalorder %s85, %s87
      %p91 = scmp.eq.s32.totalorder %s16, 0
      %p92 = por %p90, %p91
      %p93 = scmp.ne.s32.totalorder %s85, %s87
      %p94 = scmp.eq.s32.totalorder %s21, 1
      %p95 = por %p93, %p94
      %p96 = scmp.ne.s32.totalorder %s87, %s88
      %p97 = scmp.eq.s32.totalorder %s21, 0
      %p98 = por %p96, %p97
      %p99 = scmp.ne.s32.totalorder %s87, %s88
      %p100 = scmp.eq.s32.totalorder %s22, 1
      %p101 = por %p99, %p100
      %p103 = scmp.ne.s32.totalorder %s88, %s102
      %p104 = scmp.eq.s32.totalorder %s22, 0
      %p105 = por %p103, %p104
      %s107 = sadd.s32 %s106, 1
      %p110 = scmp.eq.s32.totalorder %s16, 1
      %p111 = scmp.ne.s32.totalorder %s106, %s108
      %p112 = scmp.eq.s32.totalorder %s16, 0
      %p113 = por %p111, %p112
      %p114 = scmp.ne.s32.totalorder %s106, %s108
      %p115 = scmp.eq.s32.totalorder %s21, 1
      %p116 = por %p114, %p115
      %p117 = scmp.ne.s32.totalorder %s108, %s109
      %p118 = scmp.eq.s32.totalorder %s21, 0
      %p119 = por %p117, %p118
      %p120 = scmp.ne.s32.totalorder %s108, %s109
      %p121 = scmp.eq.s32.totalorder %s22, 1
      %p122 = por %p120, %p121
      %p124 = scmp.ne.s32.totalorder %s109, %s123
      %p125 = scmp.eq.s32.totalorder %s22, 0
      %p126 = por %p124, %p125
      %s128 = sadd.s32 %s127, 1
      %p131 = scmp.eq.s32.totalorder %s16, 1
      %p132 = scmp.ne.s32.totalorder %s127, %s129
      %p133 = scmp.eq.s32.totalorder %s16, 0
      %p134 = por %p132, %p133
      %p135 = scmp.ne.s32.totalorder %s127, %s129
      %p136 = scmp.eq.s32.totalorder %s21, 1
      %p137 = por %p135, %p136
      %p138 = scmp.ne.s32.totalorder %s129, %s130
      %p139 = scmp.eq.s32.totalorder %s21, 0
      %p140 = por %p138, %p139
      %p141 = scmp.ne.s32.totalorder %s129, %s130
      %p142 = scmp.eq.s32.totalorder %s22, 1
      %p143 = por %p141, %p142
      %p145 = scmp.ne.s32.totalorder %s130, %s144
      %p146 = scmp.eq.s32.totalorder %s22, 0
      %p147 = por %p145, %p146
      %s149 = sadd.s32 %s148, 1
      %p152 = scmp.eq.s32.totalorder %s16, 1
      %p153 = scmp.ne.s32.totalorder %s148, %s150
      %p154 = scmp.eq.s32.totalorder %s16, 0
      %p155 = por %p153, %p154
      %p156 = scmp.ne.s32.totalorder %s148, %s150
      %p157 = scmp.eq.s32.totalorder %s21, 1
      %p158 = por %p156, %p157
      %p159 = scmp.ne.s32.totalorder %s150, %s151
      %p160 = scmp.eq.s32.totalorder %s21, 0
      %p161 = por %p159, %p160
      %p162 = scmp.ne.s32.totalorder %s150, %s151
      %p163 = scmp.eq.s32.totalorder %s22, 1
      %p164 = por %p162, %p163
      %p166 = scmp.ne.s32.totalorder %s151, %s165
      %p167 = scmp.eq.s32.totalorder %s22, 0
      %p168 = por %p166, %p167
      %s170 = sadd.s32 %s169, 1
      %p173 = scmp.eq.s32.totalorder %s16, 1
      %p174 = scmp.ne.s32.totalorder %s169, %s171
      %p175 = scmp.eq.s32.totalorder %s16, 0
      %p176 = por %p174, %p175
      %p177 = scmp.ne.s32.totalorder %s169, %s171
      %p178 = scmp.eq.s32.totalorder %s21, 1
      %p179 = por %p177, %p178
      %p180 = scmp.ne.s32.totalorder %s171, %s172
      %p181 = scmp.eq.s32.totalorder %s21, 0
      %p182 = por %p180, %p181
      %p183 = scmp.ne.s32.totalorder %s171, %s172
      %p184 = scmp.eq.s32.totalorder %s22, 1
      %p185 = por %p183, %p184
      %p187 = scmp.ne.s32.totalorder %s172, %s186
      %p188 = scmp.eq.s32.totalorder %s22, 0
      %p189 = por %p187, %p188
      %s190 = ssub.s32 %s23, %s35
      %s191 = ssub.s32 %s24, %s31
      %s192 = sor.u32 %s190, %s191
      %p193 = scmp.eq.s32.totalorder %s192, 0
      %s195 = sadd.s32 %s194, 1
      %s196 = scalar_select %p193, %s194, %s195
      %p199 = pneg %p193
      %p200 = scmp.eq.s32.totalorder %s16, 1
      %p201 = por %p199, %p200
      %p202 = scmp.ne.s32.totalorder %s194, %s197
      %p203 = scmp.eq.s32.totalorder %s16, 0
      %p204 = por %p202, %p203
      %p205 = scmp.ne.s32.totalorder %s194, %s197
      %p206 = scmp.eq.s32.totalorder %s21, 1
      %p207 = por %p205, %p206
      %p208 = scmp.ne.s32.totalorder %s197, %s198
      %p209 = scmp.eq.s32.totalorder %s21, 0
      %p210 = por %p208, %p209
      %p211 = scmp.ne.s32.totalorder %s197, %s198
      %p212 = scmp.eq.s32.totalorder %s22, 1
      %p213 = por %p211, %p212
      %p215 = scmp.ne.s32.totalorder %s198, %s214
      %p216 = scmp.eq.s32.totalorder %s22, 0
      %p217 = por %p215, %p216
      %p218 = scmp.le.s32.totalorder 1, %s16
      %p219 = scmp.lt.s32.totalorder %s16, 3
      %p220 = pnand %p218, %p219
      %p221 = pneg %p220
      // Predicated region
      $region9: #{tpu_custom_call.1} parent=5 // pred_check
        _
      $region10: #{tpu_custom_call.1} parent=5 // pred_check_branch
        %223 = sbr.rel (%p220) target = $region12
      $region11: #{tpu_custom_call.1} parent=5 // pred_region
        %s224 = ssub.s32 %s16, 1
        // Predicated region
        $region13: #{tpu_custom_call.1} parent=11 // pred_check
          %p225 = pneg %p77
        $region14: #{tpu_custom_call.1} parent=11 // pred_check_branch
          %227 = sbr.rel (%p225) target = $region16
        $region15: #{tpu_custom_call.1} parent=11 // pred_region
          _
        $region16: #{tpu_custom_call.1} parent=11 // pred_fallthru
          _
        // Predicated region
        $region17: #{tpu_custom_call.1} parent=11 // pred_check
          %p228 = pneg %p98
        $region18: #{tpu_custom_call.1} parent=11 // pred_check_branch
          %230 = sbr.rel (%p228) target = $region20
        $region19: #{tpu_custom_call.1} parent=11 // pred_region
          _
        $region20: #{tpu_custom_call.1} parent=11 // pred_fallthru
          _
        // Predicated region
        $region21: #{tpu_custom_call.1} parent=11 // pred_check
          %p231 = pneg %p119
        $region22: #{tpu_custom_call.1} parent=11 // pred_check_branch
          %233 = sbr.rel (%p231) target = $region24
        $region23: #{tpu_custom_call.1} parent=11 // pred_region
          _
        $region24: #{tpu_custom_call.1} parent=11 // pred_fallthru
          _
        // Predicated region
        $region25: #{tpu_custom_call.1} parent=11 // pred_check
          %p234 = pneg %p140
        $region26: #{tpu_custom_call.1} parent=11 // pred_check_branch
          %236 = sbr.rel (%p234) target = $region28
        $region27: #{tpu_custom_call.1} parent=11 // pred_region
          _
        $region28: #{tpu_custom_call.1} parent=11 // pred_fallthru
          _
        // Predicated region
        $region29: #{tpu_custom_call.1} parent=11 // pred_check
          %p237 = pneg %p161
        $region30: #{tpu_custom_call.1} parent=11 // pred_check_branch
          %239 = sbr.rel (%p237) target = $region32
        $region31: #{tpu_custom_call.1} parent=11 // pred_region
          _
        $region32: #{tpu_custom_call.1} parent=11 // pred_fallthru
          _
        // Predicated region
        $region33: #{tpu_custom_call.1} parent=11 // pred_check
          %p240 = pneg %p182
        $region34: #{tpu_custom_call.1} parent=11 // pred_check_branch
          %242 = sbr.rel (%p240) target = $region36
        $region35: #{tpu_custom_call.1} parent=11 // pred_region
          _
        $region36: #{tpu_custom_call.1} parent=11 // pred_fallthru
          _
      $region12: #{tpu_custom_call.1} parent=5 // pred_fallthru
        _
      %p243 = scmp.lt.s32.totalorder %s16, 2
      // Predicated region
      $region37: #{tpu_custom_call.1} parent=5 // pred_check
        %p244 = pneg %p243
      $region38: #{tpu_custom_call.1} parent=5 // pred_check_branch
        %246 = sbr.rel (%p244) target = $region40
      $region39: #{tpu_custom_call.1} parent=5 // pred_region
        // Predicated region
        $region41: #{tpu_custom_call.1} parent=39 // pred_check
          %p247 = pneg %p50
        $region42: #{tpu_custom_call.1} parent=39 // pred_check_branch
          %249 = sbr.rel (%p247) target = $region44
        $region43: #{tpu_custom_call.1} parent=39 // pred_region
          %p250 = scmp.lt.s32.totalorder %s23, 1
          %s251 = scalar_select %p250, %s23, 1
          %p252 = scmp.lt.s32.totalorder %s24, 0
          %s253 = scalar_select %p252, %s24, 0
          %s254 = smul.addr %s253, 24
          %s255 = smul.addr %s251, 24
          %s256 = sadd.s32 %s254, %s255
          %s257 = smul.addr %s256, 4
          %s258 = scalar_lea.vmem %s0, %s257
        $region44: #{tpu_custom_call.1} parent=39 // pred_fallthru
          _
      $region40: #{tpu_custom_call.1} parent=5 // pred_fallthru
        _
      %p259 = scmp.le.s32.totalorder 1, %s16
      %p260 = scmp.lt.s32.totalorder %s16, 3
      %p261 = pnand %p259, %p260
      %p262 = pneg %p261
      // Predicated region
      $region45: #{tpu_custom_call.1} parent=5 // pred_check
        _
      $region46: #{tpu_custom_call.1} parent=5 // pred_check_branch
        %264 = sbr.rel (%p261) target = $region48
      $region47: #{tpu_custom_call.1} parent=5 // pred_region
        %s265 = ssub.s32 %s16, 1
        %p266 = scmp.lt.s32.totalorder %s25, 1
        %s267 = scalar_select %p266, %s25, 1
        %p268 = scmp.lt.s32.totalorder %s26, 0
        %s269 = scalar_select %p268, %s26, 0
        %s270 = smul.addr %s269, 24
        %s271 = smul.addr %s267, 24
        %s272 = sadd.s32 %s270, %s271
        %s273 = smul.addr %s272, 4
        %s274 = scalar_lea.vmem %s0, %s273
        %p275 = pneg %p56
        %p276 = pneg %p53
        %p277 = pneg %p77
        %p278 = pneg %p74
        %p279 = pneg %p98
        %p280 = pneg %p95
        %p281 = pneg %p119
        %p282 = pneg %p116
        %p283 = pneg %p140
        %p284 = pneg %p137
        %p285 = pneg %p161
        %p286 = pneg %p158
        %p287 = pneg %p182
        %p288 = pneg %p179
        %p289 = pneg %p210
        %p290 = pneg %p207
        %s291 = sand.u32 %s197, 1
        %s292 = scalar_lea.sflag [#allocation3], %s291
        %s293 = sand.u32 %s197, 1
        %s294 = smul.addr %s293, 8
        %s295 = scalar_lea.vmem [#allocation2], %s294
        %p296 = scmp.lt.s32.totalorder %s25, 1
        %s297 = scalar_select %p296, %s25, 1
        %p298 = scmp.lt.s32.totalorder %s26, 0
        %s299 = scalar_select %p298, %s26, 0
        %s300 = smul.addr %s299, 24
        %s301 = smul.addr %s297, 24
        %s302 = sadd.s32 %s300, %s301
        %s303 = smul.addr %s302, 4
        %s304 = scalar_lea.vmem %s0, %s303
        %v306 = vld [vmem:[%s304] sm:$0xf]
        %v307 = vld [vmem:[%s304 + $0x4] sm:$0xf]
        %v308 = vld [vmem:[%s304 + $0x8] sm:$0xf]
        %v309 = vld [vmem:[%s304 + $0xc] sm:$0xf]
        %v310 = vld [vmem:[%s304 + $0x10] sm:$0xf]
        %v311 = vld [vmem:[%s304 + $0x14] sm:$0xf]
        %v312 = vld [vmem:[%s304 + $0x18] sm:$0xf]
        %v313 = vld [vmem:[%s304 + $0x1c] sm:$0xf]
        %v314 = vld [vmem:[%s304 + $0x20] sm:$0xf]
        %v315 = vld [vmem:[%s304 + $0x24] sm:$0xf]
        %v316 = vld [vmem:[%s304 + $0x28] sm:$0xf]
        %v317 = vld [vmem:[%s304 + $0x2c] sm:$0xf]
        %v318 = vld [vmem:[%s304 + $0x30] sm:$0xf]
        %v319 = vld [vmem:[%s304 + $0x34] sm:$0xf]
        %v320 = vld [vmem:[%s304 + $0x38] sm:$0xf]
        %v321 = vld [vmem:[%s304 + $0x3c] sm:$0xf]
        %v322 = vld [vmem:[%s304 + $0x40] sm:$0xf]
        %v323 = vld [vmem:[%s304 + $0x44] sm:$0xf]
        %v324 = vld [vmem:[%s304 + $0x48] sm:$0xf]
        %v325 = vld [vmem:[%s304 + $0x4c] sm:$0xf]
        %v326 = vld [vmem:[%s304 + $0x50] sm:$0xf]
        %v327 = vld [vmem:[%s304 + $0x54] sm:$0xf]
        %v328 = vld [vmem:[%s304 + $0x58] sm:$0xf]
        %v329 = vld [vmem:[%s304 + $0x5c] sm:$0xf]
        %v330 = vmax.bf16 %v306, %v307
        %v331 = vmax.bf16 %v308, %v309
        %v332 = vmax.bf16 %v310, %v311
        %v333 = vmax.bf16 %v312, %v313
        %v334 = vmax.bf16 %v314, %v315
        %v335 = vmax.bf16 %v316, %v317
        %v336 = vmax.bf16 %v318, %v319
        %v337 = vmax.bf16 %v320, %v321
        %v338 = vmax.bf16 %v322, %v323
        %v339 = vmax.bf16 %v324, %v325
        %v340 = vmax.bf16 %v326, %v327
        %v341 = vmax.bf16 %v328, %v329
        %354 = vrot.lane.b32.xlu0 %v330, 124
        %v355 = vpop.permute.xlu0 %354
        %356 = vrot.lane.b32.xlu0 %v331, 124
        %v357 = vpop.permute.xlu0 %356
        %358 = vrot.lane.b32.xlu0 %v332, 124
        %v359 = vpop.permute.xlu0 %358
        %360 = vrot.lane.b32.xlu0 %v333, 124
        %v361 = vpop.permute.xlu0 %360
        %362 = vrot.lane.b32.xlu0 %v334, 124
        %v363 = vpop.permute.xlu0 %362
        %364 = vrot.lane.b32.xlu0 %v335, 124
        %v365 = vpop.permute.xlu0 %364
        %366 = vrot.lane.b32.xlu0 %v336, 124
        %v367 = vpop.permute.xlu0 %366
        %368 = vrot.lane.b32.xlu0 %v337, 124
        %v369 = vpop.permute.xlu0 %368
        %370 = vrot.lane.b32.xlu0 %v338, 124
        %v371 = vpop.permute.xlu0 %370
        %372 = vrot.lane.b32.xlu0 %v339, 124
        %v373 = vpop.permute.xlu0 %372
        %374 = vrot.lane.b32.xlu0 %v340, 124
        %v375 = vpop.permute.xlu0 %374
        %376 = vrot.lane.b32.xlu0 %v341, 124
        %v377 = vpop.permute.xlu0 %376
        %v390 = vmax.bf16 %v330, %v355
        %v391 = vmax.bf16 %v331, %v357
        %v392 = vmax.bf16 %v332, %v359
        %v393 = vmax.bf16 %v333, %v361
        %v394 = vmax.bf16 %v334, %v363
        %v395 = vmax.bf16 %v335, %v365
        %v396 = vmax.bf16 %v336, %v367
        %v397 = vmax.bf16 %v337, %v369
        %v398 = vmax.bf16 %v338, %v371
        %v399 = vmax.bf16 %v339, %v373
        %v400 = vmax.bf16 %v340, %v375
        %v401 = vmax.bf16 %v341, %v377
        %v412 = vunpack.c.l.b16 %v390
        %v413 = vunpack.c.l.b16 %v391
        %v414 = vunpack.c.l.b16 %v392
        %v415 = vunpack.c.l.b16 %v393
        %v416 = vunpack.c.l.b16 %v394
        %v417 = vunpack.c.l.b16 %v395
        %v418 = vunpack.c.l.b16 %v396
        %v419 = vunpack.c.l.b16 %v397
        %v420 = vunpack.c.l.b16 %v398
        %v421 = vunpack.c.l.b16 %v399
        %v422 = vpack.c.b16 %v412, %v412
        %v423 = vpack.c.b16 %v413, %v413
        %v424 = vpack.c.b16 %v414, %v414
        %v425 = vpack.c.b16 %v415, %v415
        %v426 = vpack.c.b16 %v416, %v416
        %v427 = vpack.c.b16 %v417, %v417
        %v428 = vpack.c.b16 %v418, %v418
        %v429 = vpack.c.b16 %v419, %v419
        %v430 = vpack.c.b16 %v420, %v420
        %v431 = vpack.c.b16 %v421, %v421
        %v433 = vshrl.u32 %v422, 16
        %v435 = vrot.slane %v433, 7
        %v436 = vshll.u32 %v422, 16
        %v438 = vor.u32 %v435, %v436
        %v440 = vshrl.u32 %v423, 16
        %v442 = vrot.slane %v440, 7
        %v443 = vshll.u32 %v423, 16
        %v445 = vor.u32 %v442, %v443
        %v447 = vshrl.u32 %v424, 16
        %v449 = vrot.slane %v447, 7
        %v450 = vshll.u32 %v424, 16
        %v452 = vor.u32 %v449, %v450
        %v454 = vshrl.u32 %v425, 16
        %v456 = vrot.slane %v454, 7
        %v457 = vshll.u32 %v425, 16
        %v459 = vor.u32 %v456, %v457
        %v461 = vshrl.u32 %v426, 16
        %v463 = vrot.slane %v461, 7
        %v464 = vshll.u32 %v426, 16
        %v466 = vor.u32 %v463, %v464
        %v468 = vshrl.u32 %v427, 16
        %v470 = vrot.slane %v468, 7
        %v471 = vshll.u32 %v427, 16
        %v473 = vor.u32 %v470, %v471
        %v475 = vshrl.u32 %v428, 16
        %v477 = vrot.slane %v475, 7
        %v478 = vshll.u32 %v428, 16
        %v480 = vor.u32 %v477, %v478
        %v482 = vshrl.u32 %v429, 16
        %v484 = vrot.slane %v482, 7
        %v485 = vshll.u32 %v429, 16
        %v487 = vor.u32 %v484, %v485
        %v489 = vshrl.u32 %v430, 16
        %v491 = vrot.slane %v489, 7
        %v492 = vshll.u32 %v430, 16
        %v494 = vor.u32 %v491, %v492
        %v496 = vshrl.u32 %v431, 16
        %v498 = vrot.slane %v496, 7
        %v499 = vshll.u32 %v431, 16
        %v501 = vor.u32 %v498, %v499
        %vm512 = vcmask 1040384
        %vm513 = vsmask.f32 256
        %vm514 = vmand %vm512, %vm513
        %v515 = vsel %vm514, 0, %v438
        %v516 = vsel %vm514, 0, %v445
        %v517 = vsel %vm514, 0, %v452
        %v518 = vsel %vm514, 0, %v459
        %v519 = vsel %vm514, 0, %v466
        %v520 = vsel %vm514, 0, %v473
        %v521 = vsel %vm514, 0, %v480
        %v522 = vsel %vm514, 0, %v487
        %v523 = vsel %vm514, 0, %v494
        %v524 = vsel %vm514, 0, %v501
        %v525 = vrot.slane %v436, 1
        %v526 = vor.u32 %v433, %v525
        %v527 = vrot.slane %v443, 1
        %v528 = vor.u32 %v440, %v527
        %v529 = vrot.slane %v450, 1
        %v530 = vor.u32 %v447, %v529
        %v531 = vrot.slane %v457, 1
        %v532 = vor.u32 %v454, %v531
        %v533 = vrot.slane %v464, 1
        %v534 = vor.u32 %v461, %v533
        %v535 = vrot.slane %v471, 1
        %v536 = vor.u32 %v468, %v535
        %v537 = vrot.slane %v478, 1
        %v538 = vor.u32 %v475, %v537
        %v539 = vrot.slane %v485, 1
        %v540 = vor.u32 %v482, %v539
        %v541 = vrot.slane %v492, 1
        %v542 = vor.u32 %v489, %v541
        %v543 = vrot.slane %v499, 1
        %v544 = vor.u32 %v496, %v543
        %vm555 = vcmask 1043456
        %vm556 = vsmask.f32 3328
        %vm557 = vmand %vm555, %vm556
        %v558 = vsel %vm557, %v526, 0
        %v559 = vsel %vm557, %v528, 0
        %v560 = vsel %vm557, %v530, 0
        %v561 = vsel %vm557, %v532, 0
        %v562 = vsel %vm557, %v534, 0
        %v563 = vsel %vm557, %v536, 0
        %v564 = vsel %vm557, %v538, 0
        %v565 = vsel %vm557, %v540, 0
        %v566 = vsel %vm557, %v542, 0
        %v567 = vsel %vm557, %v544, 0
        %568 = vrot.lane.b32.xlu0 %v422, 4
        %v569 = vpop.permute.xlu0 %568
        %570 = vrot.lane.b32.xlu0 %v423, 4
        %v571 = vpop.permute.xlu0 %570
        %572 = vrot.lane.b32.xlu0 %v424, 4
        %v573 = vpop.permute.xlu0 %572
        %574 = vrot.lane.b32.xlu0 %v425, 4
        %v575 = vpop.permute.xlu0 %574
        %576 = vrot.lane.b32.xlu0 %v426, 4
        %v577 = vpop.permute.xlu0 %576
        %578 = vrot.lane.b32.xlu0 %v427, 4
        %v579 = vpop.permute.xlu0 %578
        %580 = vrot.lane.b32.xlu0 %v428, 4
        %v581 = vpop.permute.xlu0 %580
        %582 = vrot.lane.b32.xlu0 %v429, 4
        %v583 = vpop.permute.xlu0 %582
        %584 = vrot.lane.b32.xlu0 %v430, 4
        %v585 = vpop.permute.xlu0 %584
        %586 = vrot.lane.b32.xlu0 %v431, 4
        %v587 = vpop.permute.xlu0 %586
        %598 = vrot.lane.b32.xlu0 %v558, 8
        %v599 = vpop.permute.xlu0 %598
        %600 = vrot.lane.b32.xlu0 %v559, 8
        %v601 = vpop.permute.xlu0 %600
        %602 = vrot.lane.b32.xlu0 %v560, 8
        %v603 = vpop.permute.xlu0 %602
        %604 = vrot.lane.b32.xlu0 %v561, 8
        %v605 = vpop.permute.xlu0 %604
        %606 = vrot.lane.b32.xlu0 %v562, 8
        %v607 = vpop.permute.xlu0 %606
        %608 = vrot.lane.b32.xlu0 %v563, 8
        %v609 = vpop.permute.xlu0 %608
        %610 = vrot.lane.b32.xlu0 %v564, 8
        %v611 = vpop.permute.xlu0 %610
        %612 = vrot.lane.b32.xlu0 %v565, 8
        %v613 = vpop.permute.xlu0 %612
        %614 = vrot.lane.b32.xlu0 %v566, 8
        %v615 = vpop.permute.xlu0 %614
        %616 = vrot.lane.b32.xlu0 %v567, 8
        %v617 = vpop.permute.xlu0 %616
        %vm618 = vcmask 31744
        %v621 = vsel %vm618, %v515, %v569
        %v624 = vsel %vm618, %v516, %v571
        %v627 = vsel %vm618, %v517, %v573
        %v630 = vsel %vm618, %v518, %v575
        %v633 = vsel %vm618, %v519, %v577
        %v636 = vsel %vm618, %v520, %v579
        %v639 = vsel %vm618, %v521, %v581
        %v642 = vsel %vm618, %v522, %v583
        %v645 = vsel %vm618, %v523, %v585
        %v648 = vsel %vm618, %v524, %v587
        %vm649 = vcmask 64512
        %v651 = vsel %vm649, %v621, %v599
        %v653 = vsel %vm649, %v624, %v601
        %v655 = vsel %vm649, %v627, %v603
        %v657 = vsel %vm649, %v630, %v605
        %v659 = vsel %vm649, %v633, %v607
        %v661 = vsel %vm649, %v636, %v609
        %v663 = vsel %vm649, %v639, %v611
        %v665 = vsel %vm649, %v642, %v613
        %v667 = vsel %vm649, %v645, %v615
        %v669 = vsel %vm649, %v648, %v617
        %v670 = vld [vmem:[%s1] sm:$0xf]
        %v671 = vld [vmem:[%s1 + $0x4] sm:$0x3]
        %v673 = vunpack.c.l.b16 %v400
        %v674 = vpack.c.b16 %v673, %v673
        %v676 = vshrl.u32 %v674, 16
        %v678 = vrot.slane %v676, 7
        %v679 = vshll.u32 %v674, 16
        %v681 = vor.u32 %v678, %v679
        %v683 = vsel %vm514, 0, %v681
        %v684 = vrot.slane %v679, 1
        %v685 = vor.u32 %v676, %v684
        %v687 = vsel %vm557, %v685, 0
        %688 = vrot.lane.b32.xlu0 %v674, 4
        %v689 = vpop.permute.xlu0 %688
        %691 = vrot.lane.b32.xlu0 %v687, 8
        %v692 = vpop.permute.xlu0 %691
        %v695 = vsel %vm618, %v683, %v689
        %v697 = vsel %vm649, %v695, %v692
        %s698 = scalar_lea.vmem %s1, 8
        %v699 = vld [vmem:[%s698] sm:$0xf]
        %v700 = vld [vmem:[%s698 + $0x4] sm:$0x3]
        %v711 = vunpack.c.l.b16 %v653
        %v712 = vunpack.c.l.b16 %v655
        %v713 = vunpack.c.l.b16 %v657
        %v714 = vunpack.c.l.b16 %v659
        %v715 = vunpack.c.l.b16 %v661
        %v716 = vunpack.c.l.b16 %v663
        %v717 = vunpack.c.l.b16 %v665
        %v718 = vunpack.c.l.b16 %v667
        %v719 = vunpack.c.l.b16 %v669
        %v720 = vunpack.c.l.b16 %v697
        %v721 = vpack.c.b16 %v712, %v711
        %v722 = vpack.c.b16 %v714, %v713
        %v723 = vpack.c.b16 %v716, %v715
        %v724 = vpack.c.b16 %v718, %v717
        %v725 = vpack.c.b16 %v720, %v719
        %v728 = vunpack.c.l.b16 %v699
        %v729 = vunpack.c.l.b16 %v700
        %v730 = vpack.c.b16 %v729, %v728
        %vm731 = vcmask 97280
        %v733 = vsel %vm731, %v721, 0
        %v736 = vsel %vm731, %v722, 0
        %v739 = vsel %vm731, %v723, 0
        %v742 = vsel %vm731, %v724, 0
        %v745 = vsel %vm731, %v725, 0
        %vm747 = vcmask 1045504
        %v749 = vsel %vm747, %v730, 0
        %751 = vmatprep.subr.bf16.mxu0 0
        %752 = vmatpush1.bf16.msra.mxu0 %v749
        %753 = vmatprep.subr.bf16.mxu0 0
        %754 = vmatpush1.bf16.msra.mxu0 0
        %755 = vmatprep.subr.bf16.mxu0 0
        %756 = vmatpush1.bf16.msra.mxu0 0
        %757 = vmatprep.subr.bf16.mxu0 0
        %758 = vmatpush1.bf16.msra.mxu0 0
        %759 = vmatprep.subr.bf16.mxu0 0
        %760 = vmatpush1.bf16.msra.mxu0 0
        %761 = vmatprep.subr.bf16.mxu0 0
        %762 = vmatpush1.bf16.msra.mxu0 0
        %763 = vmatprep.subr.bf16.mxu0 0
        %764 = vmatpush1.bf16.msra.mxu0 0
        %765 = vmatprep.subr.bf16.mxu0 0
        %766 = vmatpush1.bf16.msra.mxu0 0
        %767 = vmatprep.subr.bf16.mxu0 0
        %768 = vmatpush1.bf16.msra.mxu0 0
        %769 = vmatprep.subr.bf16.mxu0 0
        %770 = vmatpush1.bf16.msra.mxu0 0
        %771 = vmatprep.subr.bf16.mxu0 0
        %772 = vmatpush1.bf16.msra.mxu0 0
        %773 = vmatprep.subr.bf16.mxu0 0
        %774 = vmatpush1.bf16.msra.mxu0 0
        %775 = vmatprep.subr.bf16.mxu0 0
        %776 = vmatpush1.bf16.msra.mxu0 0
        %777 = vmatprep.subr.bf16.mxu0 0
        %778 = vmatpush1.bf16.msra.mxu0 0
        %779 = vmatprep.subr.bf16.mxu0 0
        %780 = vmatpush1.bf16.msra.mxu0 0
        %781 = vmatprep.subr.bf16.mxu0 0
        %782 = vmatpush1.bf16.msra.mxu0 0
        %783 = vmatprep.mubr.bf16.mxu0 0
        %784 = vmatmul.mubr.bf16.gmra.mrb[0].mxu0 %v733
        %v785 = vpop.f32.mrb[0].mxu0
        %v786 = vadd.f32 0.0, %v785
        %v787 = vpop.f32.mrb[0].mxu0
        %v788 = vpop.f32.mrb[0].mxu0
        %v789 = vadd.f32 0.0, %v788
        %v790 = vpop.f32.mrb[0].mxu0
        %791 = vmatprep.mubr.bf16.mxu0 0
        %792 = vmatmul.mubr.bf16.gmra.mrb[0].mxu0 %v736
        %v793 = vpop.f32.mrb[0].mxu0
        %v794 = vadd.f32 0.0, %v793
        %v795 = vpop.f32.mrb[0].mxu0
        %v796 = vpop.f32.mrb[0].mxu0
        %v797 = vadd.f32 0.0, %v796
        %v798 = vpop.f32.mrb[0].mxu0
        %799 = vmatprep.mubr.bf16.mxu0 0
        %800 = vmatmul.mubr.bf16.gmra.mrb[0].mxu0 %v739
        %v801 = vpop.f32.mrb[0].mxu0
        %v802 = vadd.f32 0.0, %v801
        %v803 = vpop.f32.mrb[0].mxu0
        %v804 = vpop.f32.mrb[0].mxu0
        %v805 = vadd.f32 0.0, %v804
        %v806 = vpop.f32.mrb[0].mxu0
        %807 = vmatprep.mubr.bf16.mxu0 0
        %808 = vmatmul.mubr.bf16.gmra.mrb[0].mxu0 %v742
        %v809 = vpop.f32.mrb[0].mxu0
        %v810 = vadd.f32 0.0, %v809
        %v811 = vpop.f32.mrb[0].mxu0
        %v812 = vpop.f32.mrb[0].mxu0
        %v813 = vadd.f32 0.0, %v812
        %v814 = vpop.f32.mrb[0].mxu0
        %815 = vmatprep.mubr.bf16.mxu0 0
        %816 = vmatmul.mubr.bf16.gmra.mrb[0].mxu0 %v745
        %v817 = vpop.f32.mrb[0].mxu0
        %v818 = vadd.f32 0.0, %v817
        %v819 = vpop.f32.mrb[0].mxu0
        %v820 = vpop.f32.mrb[0].mxu0
        %v821 = vadd.f32 0.0, %v820
        %v822 = vpop.f32.mrb[0].mxu0
        %823 = vdwg.mxu0
        %v825 = vunpack.c.l.b16 %v651
        %v826 = vpack.c.b16 %v711, %v825
        %v827 = vpack.c.b16 %v713, %v712
        %v828 = vpack.c.b16 %v715, %v714
        %v829 = vpack.c.b16 %v717, %v716
        %v830 = vpack.c.b16 %v719, %v718
        %v833 = vunpack.c.l.b16 %v670
        %v834 = vunpack.c.l.b16 %v671
        %v835 = vpack.c.b16 %v834, %v833
        %v837 = vsel %vm731, %v826, 0
        %v840 = vsel %vm731, %v827, 0
        %v843 = vsel %vm731, %v828, 0
        %v846 = vsel %vm731, %v829, 0
        %v849 = vsel %vm731, %v830, 0
        %v852 = vsel %vm747, %v835, 0
        %854 = vmatprep.subr.bf16.mxu0 0
        %855 = vmatpush1.bf16.msra.mxu0 %v852
        %856 = vmatprep.subr.bf16.mxu0 0
        %857 = vmatpush1.bf16.msra.mxu0 0
        %858 = vmatprep.subr.bf16.mxu0 0
        %859 = vmatpush1.bf16.msra.mxu0 0
        %860 = vmatprep.subr.bf16.mxu0 0
        %861 = vmatpush1.bf16.msra.mxu0 0
        %862 = vmatprep.subr.bf16.mxu0 0
        %863 = vmatpush1.bf16.msra.mxu0 0
        %864 = vmatprep.subr.bf16.mxu0 0
        %865 = vmatpush1.bf16.msra.mxu0 0
        %866 = vmatprep.subr.bf16.mxu0 0
        %867 = vmatpush1.bf16.msra.mxu0 0
        %868 = vmatprep.subr.bf16.mxu0 0
        %869 = vmatpush1.bf16.msra.mxu0 0
        %870 = vmatprep.subr.bf16.mxu0 0
        %871 = vmatpush1.bf16.msra.mxu0 0
        %872 = vmatprep.subr.bf16.mxu0 0
        %873 = vmatpush1.bf16.msra.mxu0 0
        %874 = vmatprep.subr.bf16.mxu0 0
        %875 = vmatpush1.bf16.msra.mxu0 0
        %876 = vmatprep.subr.bf16.mxu0 0
        %877 = vmatpush1.bf16.msra.mxu0 0
        %878 = vmatprep.subr.bf16.mxu0 0
        %879 = vmatpush1.bf16.msra.mxu0 0
        %880 = vmatprep.subr.bf16.mxu0 0
        %881 = vmatpush1.bf16.msra.mxu0 0
        %882 = vmatprep.subr.bf16.mxu0 0
        %883 = vmatpush1.bf16.msra.mxu0 0
        %884 = vmatprep.subr.bf16.mxu0 0
        %885 = vmatpush1.bf16.msra.mxu0 0
        %886 = vmatprep.mubr.bf16.mxu0 0
        %887 = vmatmul.mubr.bf16.gmra.mrb[0].mxu0 %v837
        %v888 = vpop.f32.mrb[0].mxu0
        %v889 = vadd.f32 %v786, %v888
        %v890 = vpop.f32.mrb[0].mxu0
        %v891 = vpop.f32.mrb[0].mxu0
        %v892 = vadd.f32 %v789, %v891
        %v893 = vpop.f32.mrb[0].mxu0
        %894 = vmatprep.mubr.bf16.mxu0 0
        %895 = vmatmul.mubr.bf16.gmra.mrb[0].mxu0 %v840
        %v896 = vpop.f32.mrb[0].mxu0
        %v897 = vadd.f32 %v794, %v896
        %v898 = vpop.f32.mrb[0].mxu0
        %v899 = vpop.f32.mrb[0].mxu0
        %v900 = vadd.f32 %v797, %v899
        %v901 = vpop.f32.mrb[0].mxu0
        %902 = vmatprep.mubr.bf16.mxu0 0
        %903 = vmatmul.mubr.bf16.gmra.mrb[0].mxu0 %v843
        %v904 = vpop.f32.mrb[0].mxu0
        %v905 = vadd.f32 %v802, %v904
        %v906 = vpop.f32.mrb[0].mxu0
        %v907 = vpop.f32.mrb[0].mxu0
        %v908 = vadd.f32 %v805, %v907
        %v909 = vpop.f32.mrb[0].mxu0
        %910 = vmatprep.mubr.bf16.mxu0 0
        %911 = vmatmul.mubr.bf16.gmra.mrb[0].mxu0 %v846
        %v912 = vpop.f32.mrb[0].mxu0
        %v913 = vadd.f32 %v810, %v912
        %v914 = vpop.f32.mrb[0].mxu0
        %v915 = vpop.f32.mrb[0].mxu0
        %v916 = vadd.f32 %v813, %v915
        %v917 = vpop.f32.mrb[0].mxu0
        %918 = vmatprep.mubr.bf16.mxu0 0
        %919 = vmatmul.mubr.bf16.gmra.mrb[0].mxu0 %v849
        %v920 = vpop.f32.mrb[0].mxu0
        %v921 = vadd.f32 %v818, %v920
        %v922 = vpop.f32.mrb[0].mxu0
        %v923 = vpop.f32.mrb[0].mxu0
        %v924 = vadd.f32 %v821, %v923
        %v925 = vpop.f32.mrb[0].mxu0
        %926 = vdwg.mxu0
        %v928 = vunpack.c.l.b16 %v401
        %v929 = vpack.c.b16 %v928, %v928
        %v931 = vshrl.u32 %v929, 16
        %v933 = vrot.slane %v931, 7
        %v934 = vshll.u32 %v929, 16
        %v936 = vor.u32 %v933, %v934
        %v938 = vsel %vm514, 0, %v936
        %v939 = vrot.slane %v934, 1
        %v940 = vor.u32 %v931, %v939
        %v942 = vsel %vm557, %v940, 0
        %943 = vrot.lane.b32.xlu0 %v929, 4
        %v944 = vpop.permute.xlu0 %943
        %946 = vrot.lane.b32.xlu0 %v942, 8
        %v947 = vpop.permute.xlu0 %946
        %v950 = vsel %vm618, %v938, %v944
        %v952 = vsel %vm649, %v950, %v947
        %s953 = scalar_lea.vmem %s1, 16
        %v954 = vld [vmem:[%s953] sm:$0xf]
        %v955 = vld [vmem:[%s953 + $0x4] sm:$0x3]
        %v957 = vunpack.c.l.b16 %v952
        %v958 = vpack.c.b16 %v957, %v720
        %v961 = vunpack.c.l.b16 %v954
        %v962 = vunpack.c.l.b16 %v955
        %v963 = vpack.c.b16 %v962, %v961
        %v965 = vsel %vm731, %v958, 0
        %v968 = vsel %vm747, %v963, 0
        %970 = vmatprep.subr.bf16.mxu0 0
        %971 = vmatpush1.bf16.msra.mxu0 %v968
        %972 = vmatprep.subr.bf16.mxu0 0
        %973 = vmatpush1.bf16.msra.mxu0 0
        %974 = vmatprep.subr.bf16.mxu0 0
        %975 = vmatpush1.bf16.msra.mxu0 0
        %976 = vmatprep.subr.bf16.mxu0 0
        %977 = vmatpush1.bf16.msra.mxu0 0
        %978 = vmatprep.subr.bf16.mxu0 0
        %979 = vmatpush1.bf16.msra.mxu0 0
        %980 = vmatprep.subr.bf16.mxu0 0
        %981 = vmatpush1.bf16.msra.mxu0 0
        %982 = vmatprep.subr.bf16.mxu0 0
        %983 = vmatpush1.bf16.msra.mxu0 0
        %984 = vmatprep.subr.bf16.mxu0 0
        %985 = vmatpush1.bf16.msra.mxu0 0
        %986 = vmatprep.subr.bf16.mxu0 0
        %987 = vmatpush1.bf16.msra.mxu0 0
        %988 = vmatprep.subr.bf16.mxu0 0
        %989 = vmatpush1.bf16.msra.mxu0 0
        %990 = vmatprep.subr.bf16.mxu0 0
        %991 = vmatpush1.bf16.msra.mxu0 0
        %992 = vmatprep.subr.bf16.mxu0 0
        %993 = vmatpush1.bf16.msra.mxu0 0
        %994 = vmatprep.subr.bf16.mxu0 0
        %995 = vmatpush1.bf16.msra.mxu0 0
        %996 = vmatprep.subr.bf16.mxu0 0
        %997 = vmatpush1.bf16.msra.mxu0 0
        %998 = vmatprep.subr.bf16.mxu0 0
        %999 = vmatpush1.bf16.msra.mxu0 0
        %1000 = vmatprep.subr.bf16.mxu0 0
        %1001 = vmatpush1.bf16.msra.mxu0 0
        %1002 = vmatprep.mubr.bf16.mxu0 0
        %1003 = vmatmul.mubr.bf16.gmra.mrb[0].mxu0 %v840
        %v1004 = vpop.f32.mrb[0].mxu0
        %v1005 = vadd.f32 0.0, %v1004
        %v1006 = vpop.f32.mrb[0].mxu0
        %v1007 = vpop.f32.mrb[0].mxu0
        %v1008 = vadd.f32 0.0, %v1007
        %v1009 = vpop.f32.mrb[0].mxu0
        %1010 = vmatprep.mubr.bf16.mxu0 0
        %1011 = vmatmul.mubr.bf16.gmra.mrb[0].mxu0 %v843
        %v1012 = vpop.f32.mrb[0].mxu0
        %v1013 = vadd.f32 0.0, %v1012
        %v1014 = vpop.f32.mrb[0].mxu0
        %v1015 = vpop.f32.mrb[0].mxu0
        %v1016 = vadd.f32 0.0, %v1015
        %v1017 = vpop.f32.mrb[0].mxu0
        %1018 = vmatprep.mubr.bf16.mxu0 0
        %1019 = vmatmul.mubr.bf16.gmra.mrb[0].mxu0 %v846
        %v1020 = vpop.f32.mrb[0].mxu0
        %v1021 = vadd.f32 0.0, %v1020
        %v1022 = vpop.f32.mrb[0].mxu0
        %v1023 = vpop.f32.mrb[0].mxu0
        %v1024 = vadd.f32 0.0, %v1023
        %v1025 = vpop.f32.mrb[0].mxu0
        %1026 = vmatprep.mubr.bf16.mxu0 0
        %1027 = vmatmul.mubr.bf16.gmra.mrb[0].mxu0 %v849
        %v1028 = vpop.f32.mrb[0].mxu0
        %v1029 = vadd.f32 0.0, %v1028
        %v1030 = vpop.f32.mrb[0].mxu0
        %v1031 = vpop.f32.mrb[0].mxu0
        %v1032 = vadd.f32 0.0, %v1031
        %v1033 = vpop.f32.mrb[0].mxu0
        %1034 = vmatprep.mubr.bf16.mxu0 0
        %1035 = vmatmul.mubr.bf16.gmra.mrb[0].mxu0 %v965
        %v1036 = vpop.f32.mrb[0].mxu0
        %v1037 = vadd.f32 0.0, %v1036
        %v1038 = vpop.f32.mrb[0].mxu0
        %v1039 = vpop.f32.mrb[0].mxu0
        %v1040 = vadd.f32 0.0, %v1039
        %v1041 = vpop.f32.mrb[0].mxu0
        %1042 = vdwg.mxu0
        %v1043 = vadd.f32 %v889, %v1005
        %v1044 = vadd.f32 %v892, %v1008
        %v1045 = vadd.f32 %v897, %v1013
        %v1046 = vadd.f32 %v900, %v1016
        %v1047 = vadd.f32 %v905, %v1021
        %v1048 = vadd.f32 %v908, %v1024
        %v1049 = vadd.f32 %v913, %v1029
        %v1050 = vadd.f32 %v916, %v1032
        %v1051 = vadd.f32 %v921, %v1037
        %v1052 = vadd.f32 %v924, %v1040
        %v1053 = vld [vmem:[%s2] sm:$0x1]
        %v1055 = vlaneseq
        %v1056 = vshrl.u32 %v1055, 7
        %v1057 = vsub.s32 0, %v1056
        %v1058 = vrot.slane %v1053, %v1057
        %v1060 = vmul.f32 %v1043, %v1058
        %v1061 = vmul.f32 %v1044, %v1058
        %v1062 = vmul.f32 %v1045, %v1058
        %v1063 = vmul.f32 %v1046, %v1058
        %v1064 = vmul.f32 %v1047, %v1058
        %v1065 = vmul.f32 %v1048, %v1058
        %v1066 = vmul.f32 %v1049, %v1058
        %v1067 = vmul.f32 %v1050, %v1058
        %v1068 = vmul.f32 %v1051, %v1058
        %v1069 = vmul.f32 %v1052, %v1058
        %v1070 = vld [vmem:[%s3] sm:$0x1]
        %v1072 = vlaneseq
        %v1073 = vshrl.u32 %v1072, 7
        %v1074 = vsub.s32 0, %v1073
        %v1075 = vrot.slane %v1070, %v1074
        %v1077 = vadd.f32 %v1060, %v1075
        %v1078 = vadd.f32 %v1061, %v1075
        %v1079 = vadd.f32 %v1062, %v1075
        %v1080 = vadd.f32 %v1063, %v1075
        %v1081 = vadd.f32 %v1064, %v1075
        %v1082 = vadd.f32 %v1065, %v1075
        %v1083 = vadd.f32 %v1066, %v1075
        %v1084 = vadd.f32 %v1067, %v1075
        %v1085 = vadd.f32 %v1068, %v1075
        %v1086 = vadd.f32 %v1069, %v1075
        %v1087 = vmax.f32 %v1077, 0.0
        %v1088 = vmax.f32 %v1078, 0.0
        %v1089 = vmax.f32 %v1079, 0.0
        %v1090 = vmax.f32 %v1080, 0.0
        %v1091 = vmax.f32 %v1081, 0.0
        %v1092 = vmax.f32 %v1082, 0.0
        %v1093 = vmax.f32 %v1083, 0.0
        %v1094 = vmax.f32 %v1084, 0.0
        %v1095 = vmax.f32 %v1085, 0.0
        %v1096 = vmax.f32 %v1086, 0.0
        %s1097 = smul.u32 %s26, 8
        %s1098 = ssub.s32 %s1097, 1
        %v1099 = vstv %s1098
        %v1100 = vadd.s32 %v1099, 1
        %v1101 = vadd.s32 %v1099, 2
        %v1102 = vadd.s32 %v1099, 3
        %v1103 = vadd.s32 %v1099, 4
        %v1104 = vadd.s32 %v1099, 5
        %v1105 = vadd.s32 %v1099, 6
        %v1106 = vadd.s32 %v1099, 7
        %v1107 = vadd.s32 %v1099, 8
        %v1108 = vadd.s32 %v1099, 9
        %vm1109 = vcmp.ge.s32.totalorder %v1099, 0
        %vm1110 = vcmp.ge.s32.totalorder %v1100, 0
        %vm1111 = vcmp.ge.s32.totalorder %v1101, 0
        %vm1112 = vcmp.ge.s32.totalorder %v1102, 0
        %vm1113 = vcmp.ge.s32.totalorder %v1103, 0
        %vm1114 = vcmp.ge.s32.totalorder %v1104, 0
        %vm1115 = vcmp.ge.s32.totalorder %v1105, 0
        %vm1116 = vcmp.ge.s32.totalorder %v1106, 0
        %vm1117 = vcmp.ge.s32.totalorder %v1107, 0
        %vm1118 = vcmp.ge.s32.totalorder %v1108, 0
        %vm1119 = vcmp.lt.s32.totalorder %v1099, 8
        %vm1120 = vcmp.lt.s32.totalorder %v1100, 8
        %vm1121 = vcmp.lt.s32.totalorder %v1101, 8
        %vm1122 = vcmp.lt.s32.totalorder %v1102, 8
        %vm1123 = vcmp.lt.s32.totalorder %v1103, 8
        %vm1124 = vcmp.lt.s32.totalorder %v1104, 8
        %vm1125 = vcmp.lt.s32.totalorder %v1105, 8
        %vm1126 = vcmp.lt.s32.totalorder %v1106, 8
        %vm1127 = vcmp.lt.s32.totalorder %v1107, 8
        %vm1128 = vcmp.lt.s32.totalorder %v1108, 8
        %vm1129 = vmand %vm1109, %vm1119
        %vm1130 = vmand %vm1110, %vm1120
        %vm1131 = vmand %vm1111, %vm1121
        %vm1132 = vmand %vm1112, %vm1122
        %vm1133 = vmand %vm1113, %vm1123
        %vm1134 = vmand %vm1114, %vm1124
        %vm1135 = vmand %vm1115, %vm1125
        %vm1136 = vmand %vm1116, %vm1126
        %vm1137 = vmand %vm1117, %vm1127
        %vm1138 = vmand %vm1118, %vm1128
        %v1139 = vsel %vm1129, 1, 0
        %v1140 = vsel %vm1130, 1, 0
        %v1141 = vsel %vm1131, 1, 0
        %v1142 = vsel %vm1132, 1, 0
        %v1143 = vsel %vm1133, 1, 0
        %v1144 = vsel %vm1134, 1, 0
        %v1145 = vsel %vm1135, 1, 0
        %v1146 = vsel %vm1136, 1, 0
        %v1147 = vsel %vm1137, 1, 0
        %v1148 = vsel %vm1138, 1, 0
        %vm1149 = vcmp.eq.s32.totalorder %v1139, 1
        %vm1150 = vcmp.eq.s32.totalorder %v1140, 1
        %vm1151 = vcmp.eq.s32.totalorder %v1141, 1
        %vm1152 = vcmp.eq.s32.totalorder %v1142, 1
        %vm1153 = vcmp.eq.s32.totalorder %v1143, 1
        %vm1154 = vcmp.eq.s32.totalorder %v1144, 1
        %vm1155 = vcmp.eq.s32.totalorder %v1145, 1
        %vm1156 = vcmp.eq.s32.totalorder %v1146, 1
        %vm1157 = vcmp.eq.s32.totalorder %v1147, 1
        %vm1158 = vcmp.eq.s32.totalorder %v1148, 1
        %v1159 = vsel %vm1149, %v1087, 0.0
        %v1160 = vsel %vm1150, %v1088, 0.0
        %v1161 = vsel %vm1151, %v1089, 0.0
        %v1162 = vsel %vm1152, %v1090, 0.0
        %v1163 = vsel %vm1153, %v1091, 0.0
        %v1164 = vsel %vm1154, %v1092, 0.0
        %v1165 = vsel %vm1155, %v1093, 0.0
        %v1166 = vsel %vm1156, %v1094, 0.0
        %v1167 = vsel %vm1157, %v1095, 0.0
        %v1168 = vsel %vm1158, %v1096, 0.0
        %v1169 = vpack.c.bf16 %v1159, %v1159
        %v1170 = vpack.c.bf16 %v1160, %v1160
        %v1171 = vpack.c.bf16 %v1161, %v1161
        %v1172 = vpack.c.bf16 %v1162, %v1162
        %v1173 = vpack.c.bf16 %v1163, %v1163
        %v1174 = vpack.c.bf16 %v1164, %v1164
        %v1175 = vpack.c.bf16 %v1165, %v1165
        %v1176 = vpack.c.bf16 %v1166, %v1166
        %v1177 = vpack.c.bf16 %v1167, %v1167
        %v1178 = vpack.c.bf16 %v1168, %v1168
        %v1180 = vshrl.u32 %v1169, 16
        %v1182 = vrot.slane %v1180, 7
        %v1183 = vshll.u32 %v1169, 16
        %v1185 = vor.u32 %v1182, %v1183
        %v1187 = vshrl.u32 %v1170, 16
        %v1189 = vrot.slane %v1187, 7
        %v1190 = vshll.u32 %v1170, 16
        %v1192 = vor.u32 %v1189, %v1190
        %v1194 = vshrl.u32 %v1171, 16
        %v1196 = vrot.slane %v1194, 7
        %v1197 = vshll.u32 %v1171, 16
        %v1199 = vor.u32 %v1196, %v1197
        %v1201 = vshrl.u32 %v1172, 16
        %v1203 = vrot.slane %v1201, 7
        %v1204 = vshll.u32 %v1172, 16
        %v1206 = vor.u32 %v1203, %v1204
        %v1208 = vshrl.u32 %v1173, 16
        %v1210 = vrot.slane %v1208, 7
        %v1211 = vshll.u32 %v1173, 16
        %v1213 = vor.u32 %v1210, %v1211
        %v1215 = vshrl.u32 %v1174, 16
        %v1217 = vrot.slane %v1215, 7
        %v1218 = vshll.u32 %v1174, 16
        %v1220 = vor.u32 %v1217, %v1218
        %v1222 = vshrl.u32 %v1175, 16
        %v1224 = vrot.slane %v1222, 7
        %v1225 = vshll.u32 %v1175, 16
        %v1227 = vor.u32 %v1224, %v1225
        %v1229 = vshrl.u32 %v1176, 16
        %v1231 = vrot.slane %v1229, 7
        %v1232 = vshll.u32 %v1176, 16
        %v1234 = vor.u32 %v1231, %v1232
        %v1243 = vsel %vm514, 0, %v1185
        %v1244 = vsel %vm514, 0, %v1192
        %v1245 = vsel %vm514, 0, %v1199
        %v1246 = vsel %vm514, 0, %v1206
        %v1247 = vsel %vm514, 0, %v1213
        %v1248 = vsel %vm514, 0, %v1220
        %v1249 = vsel %vm514, 0, %v1227
        %v1250 = vsel %vm514, 0, %v1234
        %v1251 = vrot.slane %v1183, 1
        %v1252 = vor.u32 %v1180, %v1251
        %v1253 = vrot.slane %v1190, 1
        %v1254 = vor.u32 %v1187, %v1253
        %v1255 = vrot.slane %v1197, 1
        %v1256 = vor.u32 %v1194, %v1255
        %v1257 = vrot.slane %v1204, 1
        %v1258 = vor.u32 %v1201, %v1257
        %v1259 = vrot.slane %v1211, 1
        %v1260 = vor.u32 %v1208, %v1259
        %v1261 = vrot.slane %v1218, 1
        %v1262 = vor.u32 %v1215, %v1261
        %v1263 = vrot.slane %v1225, 1
        %v1264 = vor.u32 %v1222, %v1263
        %v1265 = vrot.slane %v1232, 1
        %v1266 = vor.u32 %v1229, %v1265
        %v1275 = vsel %vm557, %v1252, 0
        %v1276 = vsel %vm557, %v1254, 0
        %v1277 = vsel %vm557, %v1256, 0
        %v1278 = vsel %vm557, %v1258, 0
        %v1279 = vsel %vm557, %v1260, 0
        %v1280 = vsel %vm557, %v1262, 0
        %v1281 = vsel %vm557, %v1264, 0
        %v1282 = vsel %vm557, %v1266, 0
        %1291 = vrot.lane.b32.xlu0 %v1169, 4
        %v1292 = vpop.permute.xlu0 %1291
        %1293 = vrot.lane.b32.xlu0 %v1170, 4
        %v1294 = vpop.permute.xlu0 %1293
        %1295 = vrot.lane.b32.xlu0 %v1171, 4
        %v1296 = vpop.permute.xlu0 %1295
        %1297 = vrot.lane.b32.xlu0 %v1172, 4
        %v1298 = vpop.permute.xlu0 %1297
        %1299 = vrot.lane.b32.xlu0 %v1173, 4
        %v1300 = vpop.permute.xlu0 %1299
        %1301 = vrot.lane.b32.xlu0 %v1174, 4
        %v1302 = vpop.permute.xlu0 %1301
        %1303 = vrot.lane.b32.xlu0 %v1175, 4
        %v1304 = vpop.permute.xlu0 %1303
        %1305 = vrot.lane.b32.xlu0 %v1176, 4
        %v1306 = vpop.permute.xlu0 %1305
        %1315 = vrot.lane.b32.xlu0 %v1275, 8
        %v1316 = vpop.permute.xlu0 %1315
        %1317 = vrot.lane.b32.xlu0 %v1276, 8
        %v1318 = vpop.permute.xlu0 %1317
        %1319 = vrot.lane.b32.xlu0 %v1277, 8
        %v1320 = vpop.permute.xlu0 %1319
        %1321 = vrot.lane.b32.xlu0 %v1278, 8
        %v1322 = vpop.permute.xlu0 %1321
        %1323 = vrot.lane.b32.xlu0 %v1279, 8
        %v1324 = vpop.permute.xlu0 %1323
        %1325 = vrot.lane.b32.xlu0 %v1280, 8
        %v1326 = vpop.permute.xlu0 %1325
        %1327 = vrot.lane.b32.xlu0 %v1281, 8
        %v1328 = vpop.permute.xlu0 %1327
        %1329 = vrot.lane.b32.xlu0 %v1282, 8
        %v1330 = vpop.permute.xlu0 %1329
        %v1333 = vsel %vm618, %v1243, %v1292
        %v1336 = vsel %vm618, %v1244, %v1294
        %v1339 = vsel %vm618, %v1245, %v1296
        %v1342 = vsel %vm618, %v1246, %v1298
        %v1345 = vsel %vm618, %v1247, %v1300
        %v1348 = vsel %vm618, %v1248, %v1302
        %v1351 = vsel %vm618, %v1249, %v1304
        %v1354 = vsel %vm618, %v1250, %v1306
        %v1356 = vsel %vm649, %v1333, %v1316
        %v1358 = vsel %vm649, %v1336, %v1318
        %v1360 = vsel %vm649, %v1339, %v1320
        %v1362 = vsel %vm649, %v1342, %v1322
        %v1364 = vsel %vm649, %v1345, %v1324
        %v1366 = vsel %vm649, %v1348, %v1326
        %v1368 = vsel %vm649, %v1351, %v1328
        %v1370 = vsel %vm649, %v1354, %v1330
        %v1371 = vld [vmem:[%s4] sm:$0xf]
        %v1372 = vld [vmem:[%s4 + $0x4] sm:$0x3]
        %v1374 = vshrl.u32 %v1177, 16
        %v1376 = vrot.slane %v1374, 7
        %v1377 = vshll.u32 %v1177, 16
        %v1379 = vor.u32 %v1376, %v1377
        %v1381 = vsel %vm514, 0, %v1379
        %v1382 = vrot.slane %v1377, 1
        %v1383 = vor.u32 %v1374, %v1382
        %v1385 = vsel %vm557, %v1383, 0
        %1387 = vrot.lane.b32.xlu0 %v1177, 4
        %v1388 = vpop.permute.xlu0 %1387
        %1390 = vrot.lane.b32.xlu0 %v1385, 8
        %v1391 = vpop.permute.xlu0 %1390
        %v1394 = vsel %vm618, %v1381, %v1388
        %v1396 = vsel %vm649, %v1394, %v1391
        %s1397 = scalar_lea.vmem %s4, 8
        %v1398 = vld [vmem:[%s1397] sm:$0xf]
        %v1399 = vld [vmem:[%s1397 + $0x4] sm:$0x3]
        %v1408 = vunpack.c.l.b16 %v1358
        %v1409 = vunpack.c.l.b16 %v1360
        %v1410 = vunpack.c.l.b16 %v1362
        %v1411 = vunpack.c.l.b16 %v1364
        %v1412 = vunpack.c.l.b16 %v1366
        %v1413 = vunpack.c.l.b16 %v1368
        %v1414 = vunpack.c.l.b16 %v1370
        %v1415 = vunpack.c.l.b16 %v1396
        %v1416 = vpack.c.b16 %v1409, %v1408
        %v1417 = vpack.c.b16 %v1411, %v1410
        %v1418 = vpack.c.b16 %v1413, %v1412
        %v1419 = vpack.c.b16 %v1415, %v1414
        %v1422 = vunpack.c.l.b16 %v1398
        %v1423 = vunpack.c.l.b16 %v1399
        %v1424 = vpack.c.b16 %v1423, %v1422
        %v1426 = vsel %vm731, %v1416, 0
        %v1429 = vsel %vm731, %v1417, 0
        %v1432 = vsel %vm731, %v1418, 0
        %v1435 = vsel %vm731, %v1419, 0
        %v1438 = vsel %vm747, %v1424, 0
        %1440 = vmatprep.subr.bf16.mxu0 0
        %1441 = vmatpush1.bf16.msra.mxu0 %v1438
        %1442 = vmatprep.subr.bf16.mxu0 0
        %1443 = vmatpush1.bf16.msra.mxu0 0
        %1444 = vmatprep.subr.bf16.mxu0 0
        %1445 = vmatpush1.bf16.msra.mxu0 0
        %1446 = vmatprep.subr.bf16.mxu0 0
        %1447 = vmatpush1.bf16.msra.mxu0 0
        %1448 = vmatprep.subr.bf16.mxu0 0
        %1449 = vmatpush1.bf16.msra.mxu0 0
        %1450 = vmatprep.subr.bf16.mxu0 0
        %1451 = vmatpush1.bf16.msra.mxu0 0
        %1452 = vmatprep.subr.bf16.mxu0 0
        %1453 = vmatpush1.bf16.msra.mxu0 0
        %1454 = vmatprep.subr.bf16.mxu0 0
        %1455 = vmatpush1.bf16.msra.mxu0 0
        %1456 = vmatprep.subr.bf16.mxu0 0
        %1457 = vmatpush1.bf16.msra.mxu0 0
        %1458 = vmatprep.subr.bf16.mxu0 0
        %1459 = vmatpush1.bf16.msra.mxu0 0
        %1460 = vmatprep.subr.bf16.mxu0 0
        %1461 = vmatpush1.bf16.msra.mxu0 0
        %1462 = vmatprep.subr.bf16.mxu0 0
        %1463 = vmatpush1.bf16.msra.mxu0 0
        %1464 = vmatprep.subr.bf16.mxu0 0
        %1465 = vmatpush1.bf16.msra.mxu0 0
        %1466 = vmatprep.subr.bf16.mxu0 0
        %1467 = vmatpush1.bf16.msra.mxu0 0
        %1468 = vmatprep.subr.bf16.mxu0 0
        %1469 = vmatpush1.bf16.msra.mxu0 0
        %1470 = vmatprep.subr.bf16.mxu0 0
        %1471 = vmatpush1.bf16.msra.mxu0 0
        %1472 = vmatprep.mubr.bf16.mxu0 0
        %1473 = vmatmul.mubr.bf16.gmra.mrb[0].mxu0 %v1426
        %v1474 = vpop.f32.mrb[0].mxu0
        %v1475 = vadd.f32 0.0, %v1474
        %v1476 = vpop.f32.mrb[0].mxu0
        %v1477 = vpop.f32.mrb[0].mxu0
        %v1478 = vadd.f32 0.0, %v1477
        %v1479 = vpop.f32.mrb[0].mxu0
        %1480 = vmatprep.mubr.bf16.mxu0 0
        %1481 = vmatmul.mubr.bf16.gmra.mrb[0].mxu0 %v1429
        %v1482 = vpop.f32.mrb[0].mxu0
        %v1483 = vadd.f32 0.0, %v1482
        %v1484 = vpop.f32.mrb[0].mxu0
        %v1485 = vpop.f32.mrb[0].mxu0
        %v1486 = vadd.f32 0.0, %v1485
        %v1487 = vpop.f32.mrb[0].mxu0
        %1488 = vmatprep.mubr.bf16.mxu0 0
        %1489 = vmatmul.mubr.bf16.gmra.mrb[0].mxu0 %v1432
        %v1490 = vpop.f32.mrb[0].mxu0
        %v1491 = vadd.f32 0.0, %v1490
        %v1492 = vpop.f32.mrb[0].mxu0
        %v1493 = vpop.f32.mrb[0].mxu0
        %v1494 = vadd.f32 0.0, %v1493
        %v1495 = vpop.f32.mrb[0].mxu0
        %1496 = vmatprep.mubr.bf16.mxu0 0
        %1497 = vmatmul.mubr.bf16.gmra.mrb[0].mxu0 %v1435
        %v1498 = vpop.f32.mrb[0].mxu0
        %v1499 = vadd.f32 0.0, %v1498
        %v1500 = vpop.f32.mrb[0].mxu0
        %v1501 = vpop.f32.mrb[0].mxu0
        %v1502 = vadd.f32 0.0, %v1501
        %v1503 = vpop.f32.mrb[0].mxu0
        %1504 = vdwg.mxu0
        %v1506 = vunpack.c.l.b16 %v1356
        %v1507 = vpack.c.b16 %v1408, %v1506
        %v1508 = vpack.c.b16 %v1410, %v1409
        %v1509 = vpack.c.b16 %v1412, %v1411
        %v1510 = vpack.c.b16 %v1414, %v1413
        %v1513 = vunpack.c.l.b16 %v1371
        %v1514 = vunpack.c.l.b16 %v1372
        %v1515 = vpack.c.b16 %v1514, %v1513
        %v1517 = vsel %vm731, %v1507, 0
        %v1520 = vsel %vm731, %v1508, 0
        %v1523 = vsel %vm731, %v1509, 0
        %v1526 = vsel %vm731, %v1510, 0
        %v1529 = vsel %vm747, %v1515, 0
        %1531 = vmatprep.subr.bf16.mxu0 0
        %1532 = vmatpush1.bf16.msra.mxu0 %v1529
        %1533 = vmatprep.subr.bf16.mxu0 0
        %1534 = vmatpush1.bf16.msra.mxu0 0
        %1535 = vmatprep.subr.bf16.mxu0 0
        %1536 = vmatpush1.bf16.msra.mxu0 0
        %1537 = vmatprep.subr.bf16.mxu0 0
        %1538 = vmatpush1.bf16.msra.mxu0 0
        %1539 = vmatprep.subr.bf16.mxu0 0
        %1540 = vmatpush1.bf16.msra.mxu0 0
        %1541 = vmatprep.subr.bf16.mxu0 0
        %1542 = vmatpush1.bf16.msra.mxu0 0
        %1543 = vmatprep.subr.bf16.mxu0 0
        %1544 = vmatpush1.bf16.msra.mxu0 0
        %1545 = vmatprep.subr.bf16.mxu0 0
        %1546 = vmatpush1.bf16.msra.mxu0 0
        %1547 = vmatprep.subr.bf16.mxu0 0
        %1548 = vmatpush1.bf16.msra.mxu0 0
        %1549 = vmatprep.subr.bf16.mxu0 0
        %1550 = vmatpush1.bf16.msra.mxu0 0
        %1551 = vmatprep.subr.bf16.mxu0 0
        %1552 = vmatpush1.bf16.msra.mxu0 0
        %1553 = vmatprep.subr.bf16.mxu0 0
        %1554 = vmatpush1.bf16.msra.mxu0 0
        %1555 = vmatprep.subr.bf16.mxu0 0
        %1556 = vmatpush1.bf16.msra.mxu0 0
        %1557 = vmatprep.subr.bf16.mxu0 0
        %1558 = vmatpush1.bf16.msra.mxu0 0
        %1559 = vmatprep.subr.bf16.mxu0 0
        %1560 = vmatpush1.bf16.msra.mxu0 0
        %1561 = vmatprep.subr.bf16.mxu0 0
        %1562 = vmatpush1.bf16.msra.mxu0 0
        %1563 = vmatprep.mubr.bf16.mxu0 0
        %1564 = vmatmul.mubr.bf16.gmra.mrb[0].mxu0 %v1517
        %v1565 = vpop.f32.mrb[0].mxu0
        %v1566 = vadd.f32 %v1475, %v1565
        %v1567 = vpop.f32.mrb[0].mxu0
        %v1568 = vpop.f32.mrb[0].mxu0
        %v1569 = vadd.f32 %v1478, %v1568
        %v1570 = vpop.f32.mrb[0].mxu0
        %1571 = vmatprep.mubr.bf16.mxu0 0
        %1572 = vmatmul.mubr.bf16.gmra.mrb[0].mxu0 %v1520
        %v1573 = vpop.f32.mrb[0].mxu0
        %v1574 = vadd.f32 %v1483, %v1573
        %v1575 = vpop.f32.mrb[0].mxu0
        %v1576 = vpop.f32.mrb[0].mxu0
        %v1577 = vadd.f32 %v1486, %v1576
        %v1578 = vpop.f32.mrb[0].mxu0
        %1579 = vmatprep.mubr.bf16.mxu0 0
        %1580 = vmatmul.mubr.bf16.gmra.mrb[0].mxu0 %v1523
        %v1581 = vpop.f32.mrb[0].mxu0
        %v1582 = vadd.f32 %v1491, %v1581
        %v1583 = vpop.f32.mrb[0].mxu0
        %v1584 = vpop.f32.mrb[0].mxu0
        %v1585 = vadd.f32 %v1494, %v1584
        %v1586 = vpop.f32.mrb[0].mxu0
        %1587 = vmatprep.mubr.bf16.mxu0 0
        %1588 = vmatmul.mubr.bf16.gmra.mrb[0].mxu0 %v1526
        %v1589 = vpop.f32.mrb[0].mxu0
        %v1590 = vadd.f32 %v1499, %v1589
        %v1591 = vpop.f32.mrb[0].mxu0
        %v1592 = vpop.f32.mrb[0].mxu0
        %v1593 = vadd.f32 %v1502, %v1592
        %v1594 = vpop.f32.mrb[0].mxu0
        %1595 = vdwg.mxu0
        %v1597 = vshrl.u32 %v1178, 16
        %v1599 = vrot.slane %v1597, 7
        %v1600 = vshll.u32 %v1178, 16
        %v1602 = vor.u32 %v1599, %v1600
        %v1604 = vsel %vm514, 0, %v1602
        %v1605 = vrot.slane %v1600, 1
        %v1606 = vor.u32 %v1597, %v1605
        %v1608 = vsel %vm557, %v1606, 0
        %1610 = vrot.lane.b32.xlu0 %v1178, 4
        %v1611 = vpop.permute.xlu0 %1610
        %1613 = vrot.lane.b32.xlu0 %v1608, 8
        %v1614 = vpop.permute.xlu0 %1613
        %v1617 = vsel %vm618, %v1604, %v1611
        %v1619 = vsel %vm649, %v1617, %v1614
        %s1620 = scalar_lea.vmem %s4, 16
        %v1621 = vld [vmem:[%s1620] sm:$0xf]
        %v1622 = vld [vmem:[%s1620 + $0x4] sm:$0x3]
        %v1624 = vunpack.c.l.b16 %v1619
        %v1625 = vpack.c.b16 %v1624, %v1415
        %v1628 = vunpack.c.l.b16 %v1621
        %v1629 = vunpack.c.l.b16 %v1622
        %v1630 = vpack.c.b16 %v1629, %v1628
        %v1632 = vsel %vm731, %v1625, 0
        %v1635 = vsel %vm747, %v1630, 0
        %1637 = vmatprep.subr.bf16.mxu0 0
        %1638 = vmatpush1.bf16.msra.mxu0 %v1635
        %1639 = vmatprep.subr.bf16.mxu0 0
        %1640 = vmatpush1.bf16.msra.mxu0 0
        %1641 = vmatprep.subr.bf16.mxu0 0
        %1642 = vmatpush1.bf16.msra.mxu0 0
        %1643 = vmatprep.subr.bf16.mxu0 0
        %1644 = vmatpush1.bf16.msra.mxu0 0
        %1645 = vmatprep.subr.bf16.mxu0 0
        %1646 = vmatpush1.bf16.msra.mxu0 0
        %1647 = vmatprep.subr.bf16.mxu0 0
        %1648 = vmatpush1.bf16.msra.mxu0 0
        %1649 = vmatprep.subr.bf16.mxu0 0
        %1650 = vmatpush1.bf16.msra.mxu0 0
        %1651 = vmatprep.subr.bf16.mxu0 0
        %1652 = vmatpush1.bf16.msra.mxu0 0
        %1653 = vmatprep.subr.bf16.mxu0 0
        %1654 = vmatpush1.bf16.msra.mxu0 0
        %1655 = vmatprep.subr.bf16.mxu0 0
        %1656 = vmatpush1.bf16.msra.mxu0 0
        %1657 = vmatprep.subr.bf16.mxu0 0
        %1658 = vmatpush1.bf16.msra.mxu0 0
        %1659 = vmatprep.subr.bf16.mxu0 0
        %1660 = vmatpush1.bf16.msra.mxu0 0
        %1661 = vmatprep.subr.bf16.mxu0 0
        %1662 = vmatpush1.bf16.msra.mxu0 0
        %1663 = vmatprep.subr.bf16.mxu0 0
        %1664 = vmatpush1.bf16.msra.mxu0 0
        %1665 = vmatprep.subr.bf16.mxu0 0
        %1666 = vmatpush1.bf16.msra.mxu0 0
        %1667 = vmatprep.subr.bf16.mxu0 0
        %1668 = vmatpush1.bf16.msra.mxu0 0
        %1669 = vmatprep.mubr.bf16.mxu0 0
        %1670 = vmatmul.mubr.bf16.gmra.mrb[0].mxu0 %v1520
        %v1671 = vpop.f32.mrb[0].mxu0
        %v1672 = vadd.f32 0.0, %v1671
        %v1673 = vpop.f32.mrb[0].mxu0
        %v1674 = vpop.f32.mrb[0].mxu0
        %v1675 = vadd.f32 0.0, %v1674
        %v1676 = vpop.f32.mrb[0].mxu0
        %1677 = vmatprep.mubr.bf16.mxu0 0
        %1678 = vmatmul.mubr.bf16.gmra.mrb[0].mxu0 %v1523
        %v1679 = vpop.f32.mrb[0].mxu0
        %v1680 = vadd.f32 0.0, %v1679
        %v1681 = vpop.f32.mrb[0].mxu0
        %v1682 = vpop.f32.mrb[0].mxu0
        %v1683 = vadd.f32 0.0, %v1682
        %v1684 = vpop.f32.mrb[0].mxu0
        %1685 = vmatprep.mubr.bf16.mxu0 0
        %1686 = vmatmul.mubr.bf16.gmra.mrb[0].mxu0 %v1526
        %v1687 = vpop.f32.mrb[0].mxu0
        %v1688 = vadd.f32 0.0, %v1687
        %v1689 = vpop.f32.mrb[0].mxu0
        %v1690 = vpop.f32.mrb[0].mxu0
        %v1691 = vadd.f32 0.0, %v1690
        %v1692 = vpop.f32.mrb[0].mxu0
        %1693 = vmatprep.mubr.bf16.mxu0 0
        %1694 = vmatmul.mubr.bf16.gmra.mrb[0].mxu0 %v1632
        %v1695 = vpop.f32.mrb[0].mxu0
        %v1696 = vadd.f32 0.0, %v1695
        %v1697 = vpop.f32.mrb[0].mxu0
        %v1698 = vpop.f32.mrb[0].mxu0
        %v1699 = vadd.f32 0.0, %v1698
        %v1700 = vpop.f32.mrb[0].mxu0
        %1701 = vdwg.mxu0
        %v1702 = vadd.f32 %v1566, %v1672
        %v1703 = vadd.f32 %v1569, %v1675
        %v1704 = vadd.f32 %v1574, %v1680
        %v1705 = vadd.f32 %v1577, %v1683
        %v1706 = vadd.f32 %v1582, %v1688
        %v1707 = vadd.f32 %v1585, %v1691
        %v1708 = vadd.f32 %v1590, %v1696
        %v1709 = vadd.f32 %v1593, %v1699
        %v1710 = vld [vmem:[%s5] sm:$0x1]
        %v1712 = vlaneseq
        %v1713 = vshrl.u32 %v1712, 7
        %v1714 = vsub.s32 0, %v1713
        %v1715 = vrot.slane %v1710, %v1714
        %v1717 = vmul.f32 %v1702, %v1715
        %v1718 = vmul.f32 %v1703, %v1715
        %v1719 = vmul.f32 %v1704, %v1715
        %v1720 = vmul.f32 %v1705, %v1715
        %v1721 = vmul.f32 %v1706, %v1715
        %v1722 = vmul.f32 %v1707, %v1715
        %v1723 = vmul.f32 %v1708, %v1715
        %v1724 = vmul.f32 %v1709, %v1715
        %v1725 = vld [vmem:[%s6] sm:$0x1]
        %v1727 = vlaneseq
        %v1728 = vshrl.u32 %v1727, 7
        %v1729 = vsub.s32 0, %v1728
        %v1730 = vrot.slane %v1725, %v1729
        %v1732 = vadd.f32 %v1717, %v1730
        %v1733 = vadd.f32 %v1718, %v1730
        %v1734 = vadd.f32 %v1719, %v1730
        %v1735 = vadd.f32 %v1720, %v1730
        %v1736 = vadd.f32 %v1721, %v1730
        %v1737 = vadd.f32 %v1722, %v1730
        %v1738 = vadd.f32 %v1723, %v1730
        %v1739 = vadd.f32 %v1724, %v1730
        %v1740 = vmax.f32 %v1732, 0.0
        %v1741 = vmax.f32 %v1733, 0.0
        %v1742 = vmax.f32 %v1734, 0.0
        %v1743 = vmax.f32 %v1735, 0.0
        %v1744 = vmax.f32 %v1736, 0.0
        %v1745 = vmax.f32 %v1737, 0.0
        %v1746 = vmax.f32 %v1738, 0.0
        %v1747 = vmax.f32 %v1739, 0.0
        %v1748 = vunpack.c.l.bf16 %v392
        %v1749 = vunpack.c.l.bf16 %v393
        %v1750 = vunpack.c.l.bf16 %v394
        %v1751 = vunpack.c.l.bf16 %v395
        %v1752 = vunpack.c.l.bf16 %v396
        %v1753 = vunpack.c.l.bf16 %v397
        %v1754 = vunpack.c.l.bf16 %v398
        %v1755 = vunpack.c.l.bf16 %v399
        %1764 = vrot.lane.b32.xlu0 %v1740, 4
        %v1765 = vpop.permute.xlu0 %1764
        %1766 = vrot.lane.b32.xlu0 %v1741, 4
        %v1767 = vpop.permute.xlu0 %1766
        %1768 = vrot.lane.b32.xlu0 %v1742, 4
        %v1769 = vpop.permute.xlu0 %1768
        %1770 = vrot.lane.b32.xlu0 %v1743, 4
        %v1771 = vpop.permute.xlu0 %1770
        %1772 = vrot.lane.b32.xlu0 %v1744, 4
        %v1773 = vpop.permute.xlu0 %1772
        %1774 = vrot.lane.b32.xlu0 %v1745, 4
        %v1775 = vpop.permute.xlu0 %1774
        %1776 = vrot.lane.b32.xlu0 %v1746, 4
        %v1777 = vpop.permute.xlu0 %1776
        %1778 = vrot.lane.b32.xlu0 %v1747, 4
        %v1779 = vpop.permute.xlu0 %1778
        %v1788 = vsel %vm618, %v1748, %v1765
        %v1789 = vsel %vm618, %v1749, %v1767
        %v1790 = vsel %vm618, %v1750, %v1769
        %v1791 = vsel %vm618, %v1751, %v1771
        %v1792 = vsel %vm618, %v1752, %v1773
        %v1793 = vsel %vm618, %v1753, %v1775
        %v1794 = vsel %vm618, %v1754, %v1777
        %v1795 = vsel %vm618, %v1755, %v1779
        %v1796 = vcombine.low %v1788, %v1790
        %v1797 = vcombine.high %v1788, %v1790
        %v1799 = vunpack.c.l.s4 1983009808
        %v1800 = vunpack.c.0.s8 %v1799
        %v1801 = vlaneseq
        %v1802 = vshrl.u32 %v1801, 7
        %v1803 = vsub.s32 %v1800, %v1802
        %v1804 = vrot.slane %v1796, %v1803
        %v1806 = vunpack.c.l.s4 1983009808
        %v1807 = vunpack.c.0.s8 %v1806
        %v1808 = vlaneseq
        %v1809 = vshrl.u32 %v1808, 7
        %v1810 = vsub.s32 %v1807, %v1809
        %v1811 = vrot.slane %v1797, %v1810
        %v1812 = vcombine.low %v1789, %v1791
        %v1813 = vcombine.high %v1789, %v1791
        %v1815 = vunpack.c.l.s4 1983009808
        %v1816 = vunpack.c.0.s8 %v1815
        %v1817 = vlaneseq
        %v1818 = vshrl.u32 %v1817, 7
        %v1819 = vsub.s32 %v1816, %v1818
        %v1820 = vrot.slane %v1812, %v1819
        %v1822 = vunpack.c.l.s4 1983009808
        %v1823 = vunpack.c.0.s8 %v1822
        %v1824 = vlaneseq
        %v1825 = vshrl.u32 %v1824, 7
        %v1826 = vsub.s32 %v1823, %v1825
        %v1827 = vrot.slane %v1813, %v1826
        %v1828 = vcombine.low %v1792, %v1794
        %v1829 = vcombine.high %v1792, %v1794
        %v1831 = vunpack.c.l.s4 1983009808
        %v1832 = vunpack.c.0.s8 %v1831
        %v1833 = vlaneseq
        %v1834 = vshrl.u32 %v1833, 7
        %v1835 = vsub.s32 %v1832, %v1834
        %v1836 = vrot.slane %v1828, %v1835
        %v1838 = vunpack.c.l.s4 1983009808
        %v1839 = vunpack.c.0.s8 %v1838
        %v1840 = vlaneseq
        %v1841 = vshrl.u32 %v1840, 7
        %v1842 = vsub.s32 %v1839, %v1841
        %v1843 = vrot.slane %v1829, %v1842
        %v1844 = vcombine.low %v1793, %v1795
        %v1845 = vcombine.high %v1793, %v1795
        %v1847 = vunpack.c.l.s4 1983009808
        %v1848 = vunpack.c.0.s8 %v1847
        %v1849 = vlaneseq
        %v1850 = vshrl.u32 %v1849, 7
        %v1851 = vsub.s32 %v1848, %v1850
        %v1852 = vrot.slane %v1844, %v1851
        %v1854 = vunpack.c.l.s4 1983009808
        %v1855 = vunpack.c.0.s8 %v1854
        %v1856 = vlaneseq
        %v1857 = vshrl.u32 %v1856, 7
        %v1858 = vsub.s32 %v1855, %v1857
        %v1859 = vrot.slane %v1845, %v1858
        %v1860 = vcombine.low %v1804, %v1820
        %v1861 = vcombine.high %v1804, %v1820
        %v1863 = vunpack.c.l.s4 1934713408
        %v1864 = vunpack.c.0.s8 %v1863
        %v1865 = vlaneseq
        %v1866 = vshrl.u32 %v1865, 7
        %v1867 = vsub.s32 %v1864, %v1866
        %v1868 = vrot.slane %v1860, %v1867
        %v1870 = vunpack.c.l.s4 1934713408
        %v1871 = vunpack.c.0.s8 %v1870
        %v1872 = vlaneseq
        %v1873 = vshrl.u32 %v1872, 7
        %v1874 = vsub.s32 %v1871, %v1873
        %v1875 = vrot.slane %v1861, %v1874
        %v1876 = vcombine.low %v1811, %v1827
        %v1877 = vcombine.high %v1811, %v1827
        %v1879 = vunpack.c.l.s4 1934713408
        %v1880 = vunpack.c.0.s8 %v1879
        %v1881 = vlaneseq
        %v1882 = vshrl.u32 %v1881, 7
        %v1883 = vsub.s32 %v1880, %v1882
        %v1884 = vrot.slane %v1876, %v1883
        %v1886 = vunpack.c.l.s4 1934713408
        %v1887 = vunpack.c.0.s8 %v1886
        %v1888 = vlaneseq
        %v1889 = vshrl.u32 %v1888, 7
        %v1890 = vsub.s32 %v1887, %v1889
        %v1891 = vrot.slane %v1877, %v1890
        %v1892 = vcombine.low %v1836, %v1852
        %v1893 = vcombine.high %v1836, %v1852
        %v1895 = vunpack.c.l.s4 1934713408
        %v1896 = vunpack.c.0.s8 %v1895
        %v1897 = vlaneseq
        %v1898 = vshrl.u32 %v1897, 7
        %v1899 = vsub.s32 %v1896, %v1898
        %v1900 = vrot.slane %v1892, %v1899
        %v1902 = vunpack.c.l.s4 1934713408
        %v1903 = vunpack.c.0.s8 %v1902
        %v1904 = vlaneseq
        %v1905 = vshrl.u32 %v1904, 7
        %v1906 = vsub.s32 %v1903, %v1905
        %v1907 = vrot.slane %v1893, %v1906
        %v1908 = vcombine.low %v1843, %v1859
        %v1909 = vcombine.high %v1843, %v1859
        %v1911 = vunpack.c.l.s4 1934713408
        %v1912 = vunpack.c.0.s8 %v1911
        %v1913 = vlaneseq
        %v1914 = vshrl.u32 %v1913, 7
        %v1915 = vsub.s32 %v1912, %v1914
        %v1916 = vrot.slane %v1908, %v1915
        %v1918 = vunpack.c.l.s4 1934713408
        %v1919 = vunpack.c.0.s8 %v1918
        %v1920 = vlaneseq
        %v1921 = vshrl.u32 %v1920, 7
        %v1922 = vsub.s32 %v1919, %v1921
        %v1923 = vrot.slane %v1909, %v1922
        %v1924 = vcombine.low %v1868, %v1900
        %v1925 = vcombine.high %v1868, %v1900
        %v1926 = vcombine.low %v1875, %v1907
        %v1927 = vcombine.high %v1875, %v1907
        %v1928 = vcombine.low %v1884, %v1916
        %v1929 = vcombine.high %v1884, %v1916
        %v1930 = vcombine.low %v1891, %v1923
        %v1931 = vcombine.high %v1891, %v1923
        %1933 = vrot.lane.b32.xlu0 %v1925, 8
        %v1934 = vpop.permute.xlu0 %1933
        %1937 = vrot.lane.b32.xlu0 %v1926, 16
        %v1938 = vpop.permute.xlu0 %1937
        %1941 = vrot.lane.b32.xlu0 %v1927, 24
        %v1942 = vpop.permute.xlu0 %1941
        %1945 = vrot.lane.b32.xlu0 %v1928, 32
        %v1946 = vpop.permute.xlu0 %1945
        %1949 = vrot.lane.b32.xlu0 %v1929, 40
        %v1950 = vpop.permute.xlu0 %1949
        %1953 = vrot.lane.b32.xlu0 %v1930, 48
        %v1954 = vpop.permute.xlu0 %1953
        %1957 = vrot.lane.b32.xlu0 %v1931, 56
        %v1958 = vpop.permute.xlu0 %1957
        %v1960 = vsel %vm649, %v1924, %v1934
        %vm1961 = vcmask 130048
        %v1962 = vsel %vm1961, %v1960, %v1938
        %vm1963 = vcmask 195584
        %v1964 = vsel %vm1963, %v1962, %v1942
        %vm1965 = vcmask 261120
        %v1966 = vsel %vm1965, %v1964, %v1946
        %vm1967 = vcmask 326656
        %v1968 = vsel %vm1967, %v1966, %v1950
        %vm1969 = vcmask 392192
        %v1970 = vsel %vm1969, %v1968, %v1954
        %vm1971 = vcmask 457728
        %v1972 = vsel %vm1971, %v1970, %v1958
        %vm1973 = vcmask 523264
        %1974 = vst.msk [vmem:[%s295] sm:$0xff] %vm1973, %v1972
        %s1975 = sand.u32 %s197, 1
        %s1976 = scalar_lea.sflag [#allocation3], %s1975
        %s1977 = sand.u32 %s197, 1
        %s1978 = smul.addr %s1977, 8
        %s1979 = scalar_lea.vmem [#allocation2], %s1978
        // Predicated region
        $region49: #{tpu_custom_call.1} parent=47 // pred_check
          %p1980 = pneg %p207
        $region50: #{tpu_custom_call.1} parent=47 // pred_check_branch
          %1982 = sbr.rel (%p1980) target = $region52
        $region51: #{tpu_custom_call.1} parent=47 // pred_region
          %s1984 = ssub.s32 128, 128
          %1985 = vsyncadd %s1976, %s1984
          %s1986 = sadd.s32 %s26, %s25
          %s1987 = smul.addr %s1986, 128
          %s1988 = scalar_lea.hbm %s7, %s1987
          %s1990 = sshll.u32 %s1979, 4
          %s1991 = int_to_ptr.vmem [resolvable:$true] %s1990
          %1993 = dma.vmem_to_hbm [thread:$0]  %s1991, 128, %s1988, %s1976
        $region52: #{tpu_custom_call.1} parent=47 // pred_fallthru
          _
      $region48: #{tpu_custom_call.1} parent=5 // pred_fallthru
        _
      %p1994 = scmp.le.s32.totalorder 2, %s16
      // Predicated region
      $region53: #{tpu_custom_call.1} parent=5 // pred_check
        %p1995 = pneg %p1994
      $region54: #{tpu_custom_call.1} parent=5 // pred_check_branch
        %1997 = sbr.rel (%p1995) target = $region56
      $region55: #{tpu_custom_call.1} parent=5 // pred_region
        %s1998 = ssub.s32 %s16, 2
        // Predicated region
        $region57: #{tpu_custom_call.1} parent=55 // pred_check
          %p1999 = pneg %p213
        $region58: #{tpu_custom_call.1} parent=55 // pred_check_branch
          %2001 = sbr.rel (%p1999) target = $region60
        $region59: #{tpu_custom_call.1} parent=55 // pred_region
          %s2002 = sand.u32 %s198, 1
          %s2003 = scalar_lea.sflag [#allocation3], %s2002
          %s2004 = sand.u32 %s198, 1
          %s2005 = smul.addr %s2004, 8
          %s2006 = scalar_lea.vmem [#allocation2], %s2005
          %2007 = dma.done %s2003, 128
        $region60: #{tpu_custom_call.1} parent=55 // pred_fallthru
          _
      $region56: #{tpu_custom_call.1} parent=5 // pred_fallthru
        _
    $region6: #{tpu_custom_call.1} parent=1 // loop_footer
      %s20 = sadd.s32 1, %s16
    $region7: #{tpu_custom_call.1} parent=1 // loop_footer_branch
      %15 = sbr.rel target = $region3
    $region8: #{tpu_custom_call.1} parent=1 // loop_exit
      _
    %2008 = vsyncpa [#allocation3], 1
    %s2009 = scalar_lea.sflag [#allocation3], 1
    %2010 = vsyncpa %s2009, 1

</llo_original>
